<compile_context>
chip_gen: v5e
topology: v5e:2x2
jax: 0.10.0
libtpu: 0.0.40
codegen_flags: <defaults>
</compile_context>

<pallas_src>
import math

import jax
import jax.numpy as jnp
from jax import lax
from jax.experimental import pallas as pl
from jax.experimental.pallas import tpu as pltpu

# Small, self-consistent shapes (scaled down from n_layers=6, n_heads=12, dim=768).
B, S = 2, 8               # batch, sequence length
N_LAYERS = 2
N_HEADS = 4
DIM = 32                  # model dim (divisible by N_HEADS)
HIDDEN = 4 * DIM          # FFN hidden dim
DH = DIM // N_HEADS       # per-head dim
QKV_DIM = 3 * DIM         # fused [q | k | v] width
LN_EPS = 1e-12            # DistilBERT LayerNorm eps
ATTN_SCALE = 1.0 / math.sqrt(DH)

VEC_ROWS = 8                          # packed per-layer vector rows
VEC_W = max(HIDDEN, QKV_DIM)          # packed per-layer vector width (lane-dense: 128)


def _layer_norm(x, gamma, beta):
    # f32 LayerNorm over the feature axis (matches HF DistilBERT, eps=1e-12)
    mu = jnp.mean(x, axis=-1, keepdims=True)
    var = jnp.mean(jnp.square(x - mu), axis=-1, keepdims=True)
    return (x - mu) * lax.rsqrt(var + LN_EPS) * gamma + beta


def _gelu(x):
    # exact (erf-based) gelu, matching HF's "gelu" activation
    return 0.5 * x * (1.0 + lax.erf(x * (1.0 / math.sqrt(2.0))))


def transformer_layer_kernel(
    x_ref,        # (BB, S, DIM)   f32   embeddings (read only at l == 0)
    abias_ref,    # (BB, 1, S)     f32   additive attention bias (0 / finfo.min)
    wqkv_ref,     # (1, DIM, 3*DIM)      bf16  fused [q|k|v] weights (scale folded into q)
    wo_ref,       # (1, DIM, DIM)        bf16  output proj (head_mask folded into rows)
    w1_ref,       # (1, DIM, HIDDEN)     bf16
    w2_ref,       # (1, HIDDEN, DIM)     bf16
    vec_ref,      # (1, 8, VEC_W)        f32   packed biases / LayerNorm params
    out_ref,      # (BB, S, DIM)   f32   carried hidden state (resident across l)
):
    layer = pl.program_id(1)

    # Seed the carried hidden state from the embeddings on the first layer.
    @pl.when(layer == 0)
    def _():
        out_ref[...] = x_ref[...]

    bb, s, dim = out_ref.shape
    hidden = w1_ref.shape[2]
    m = bb * s                                   # matmul M dimension = BB*S

    h = out_ref[...].reshape(m, dim)             # (M, DIM) f32 hidden state
    h_bf = h.astype(jnp.bfloat16)

    vecs = vec_ref[0]                            # (8, VEC_W) f32 — one DMA per layer
    bqkv = vecs[0:1, :QKV_DIM]                   # (1, 3*DIM) (q part already scaled)
    bo   = vecs[1:2, :dim]
    ln1g = vecs[2:3, :dim]
    ln1b = vecs[3:4, :dim]
    b1   = vecs[4:5, :hidden]
    b2   = vecs[5:6, :dim]
    ln2g = vecs[6:7, :dim]
    ln2b = vecs[7:8, :dim]

    # --- multi-head self-attention ---
    # Fused QKV projection: single bf16 MXU matmul with M = BB*S, f32 accumulate.
    qkv = jnp.dot(h_bf, wqkv_ref[0], preferred_element_type=jnp.float32) + bqkv
    qkv = qkv.astype(jnp.bfloat16)               # (M, 3*DIM)

    # [all-q | all-k | all-v] layout -> DIM-wide lane-aligned slices, then a
    # leading-axis head stack (head-major rows: n = h*BB + b).
    # TODO(synk): at real scale (DIM=768) a reshape + pltpu.einshape transpose would
    # avoid the per-head sub-128-lane slices; the stack form is kept for robustness.
    def split_heads(x2d):
        x3 = x2d.reshape(bb, s, dim)
        return jnp.stack(
            [x3[:, :, hh * DH:(hh + 1) * DH] for hh in range(N_HEADS)],
            axis=0).reshape(N_HEADS * bb, s, DH)

    q = split_heads(qkv[:, 0 * dim:1 * dim])     # (H*BB, S, DH) bf16 (pre-scaled)
    k = split_heads(qkv[:, 1 * dim:2 * dim])
    v = split_heads(qkv[:, 2 * dim:3 * dim])

    # Batched (all heads x batches at once) attention scores + additive mask bias.
    scores = jnp.einsum('nqd,nkd->nqk', q, k,
                        preferred_element_type=jnp.float32)          # (H*BB, S, S) f32
    bias = jnp.concatenate([abias_ref[...]] * N_HEADS, axis=0)       # (H*BB, 1, S)
    scores = scores + bias
    scores = scores - jnp.max(scores, axis=-1, keepdims=True)        # stable softmax
    p = jnp.exp(scores)
    p = p * pl.reciprocal(jnp.sum(p, axis=-1, keepdims=True), approx=True)
    p = p.astype(jnp.bfloat16)                   # cast early: one live f32 (N,S,S)
    # attention dropout (p=0.2) is identity in eval mode

    ctx = jnp.einsum('nqk,nkd->nqd', p, v,
                     preferred_element_type=jnp.float32)             # (H*BB, S, DH)

    # Merge heads back to (M, DIM) (lane order [head0 | head1 | ...]) and do ONE
    # (M, DIM) x (DIM, DIM) output projection — no (H, S, DIM) f32 temporary.
    ctx = ctx.astype(jnp.bfloat16).reshape(N_HEADS, bb, s, DH)
    ctx2d = jnp.concatenate(
        [ctx[hh].reshape(m, DH) for hh in range(N_HEADS)], axis=-1)  # (M, DIM) bf16

    attn = jnp.dot(ctx2d, wo_ref[0], preferred_element_type=jnp.float32) + bo
    sa = _layer_norm(attn + h, ln1g, ln1b)                           # post-LN residual

    # --- feed-forward network ---
    hid = jnp.dot(sa.astype(jnp.bfloat16), w1_ref[0],
                  preferred_element_type=jnp.float32) + b1           # (M, HIDDEN)
    hid = _gelu(hid)
    # FFN dropout (p=0.2) is identity in eval mode
    ffn = jnp.dot(hid.astype(jnp.bfloat16), w2_ref[0],
                  preferred_element_type=jnp.float32) + b2           # (M, DIM)
    new_h = _layer_norm(ffn + sa, ln2g, ln2b)

    out_ref[...] = new_h.reshape(bb, s, dim)


def pack_params(params, head_mask):
    """Repack per-layer torch-style params into the kernel layout.

    - wqkv: (L, DIM, 3*DIM) bf16, columns [all-q | all-k | all-v]; the 1/sqrt(DH)
      attention scale is folded into the q columns and q bias.
    - wo:   (L, DIM, DIM) bf16 with head_mask folded into the rows of each head.
    - w1/w2: bf16
    - vecs: (L, 8, VEC_W) f32 packed biases + LayerNorm params (one slab per layer)
    """
    L = params['wq'].shape[0]

    wq = params['wq'] * ATTN_SCALE
    bq = params['bq'] * ATTN_SCALE
    wqkv = jnp.concatenate([wq, params['wk'], params['wv']], axis=-1)   # (L, DIM, 3*DIM)
    bqkv = jnp.concatenate([bq, params['bk'], params['bv']], axis=-1)   # (L, 3*DIM)

    wo = (params['wo'].reshape(L, N_HEADS, DH, DIM)
          * head_mask[:, :, None, None]).reshape(L, DIM, DIM)

    vecs = jnp.zeros((L, VEC_ROWS, VEC_W), jnp.float32)
    vecs = vecs.at[:, 0, :QKV_DIM].set(bqkv)
    vecs = vecs.at[:, 1, :DIM].set(params['bo'])
    vecs = vecs.at[:, 2, :DIM].set(params['ln1g'])
    vecs = vecs.at[:, 3, :DIM].set(params['ln1b'])
    vecs = vecs.at[:, 4, :HIDDEN].set(params['b1'])
    vecs = vecs.at[:, 5, :DIM].set(params['b2'])
    vecs = vecs.at[:, 6, :DIM].set(params['ln2g'])
    vecs = vecs.at[:, 7, :DIM].set(params['ln2b'])

    return {
        'wqkv': wqkv.astype(jnp.bfloat16),
        'wo': wo.astype(jnp.bfloat16),
        'w1': params['w1'].astype(jnp.bfloat16),
        'w2': params['w2'].astype(jnp.bfloat16),
        'vecs': vecs,
    }


def distilbert_encoder(inputs_embeds, attention_mask, head_mask, params, *,
                       batch_splits=1):
    """Forward pass of the DistilBERT Transformer stack (eval mode).

    batch_splits=1: weights streamed once per layer (best on single-TC v5e/v6e).
    batch_splits=2: leading "parallel" grid axis shards the batch across the two
    TensorCores of v7x (weights streamed once per layer per core).
    """
    L = params['wq'].shape[0]
    kp = pack_params(params, head_mask)

    bsz, seq, dim = inputs_embeds.shape
    assert bsz % batch_splits == 0
    bb = bsz // batch_splits

    # Additive attention bias: 0 where kept, finfo.min where masked (HF-style).
    attn_bias = ((1.0 - attention_mask) * jnp.finfo(jnp.float32).min
                 ).astype(jnp.float32)[:, None, :]                    # (B, 1, S)

    in_specs = [
        pl.BlockSpec((bb, seq, dim), lambda c, l: (c, 0, 0)),          # inputs_embeds
        pl.BlockSpec((bb, 1, seq), lambda c, l: (c, 0, 0)),            # attn bias
        pl.BlockSpec((1, dim, QKV_DIM), lambda c, l: (l, 0, 0)),       # wqkv (bf16)
        pl.BlockSpec((1, dim, dim), lambda c, l: (l, 0, 0)),           # wo   (bf16)
        pl.BlockSpec((1, dim, HIDDEN), lambda c, l: (l, 0, 0)),        # w1   (bf16)
        pl.BlockSpec((1, HIDDEN, dim), lambda c, l: (l, 0, 0)),        # w2   (bf16)
        pl.BlockSpec((1, VEC_ROWS, VEC_W), lambda c, l: (l, 0, 0)),    # packed vectors
    ]

    grid_spec = pltpu.PrefetchScalarGridSpec(
        num_scalar_prefetch=0,
        grid=(batch_splits, L),                    # (parallel batch-split, carried layer)
        in_specs=in_specs,
        out_specs=pl.BlockSpec((bb, seq, dim), lambda c, l: (c, 0, 0)),
        scratch_shapes=[],
    )

    return pl.pallas_call(
        transformer_layer_kernel,
        out_shape=jax.ShapeDtypeStruct((bsz, seq, dim), jnp.float32),
        grid_spec=grid_spec,
        # Embeddings buffer is donated and reused as the output (hidden state starts
        # in place; no extra HBM allocation).  Callers must not reuse inputs_embeds.
        input_output_aliases={0: 0},
        compiler_params=pltpu.CompilerParams(
            dimension_semantics=("parallel", "arbitrary"),
            # 48 MiB leaves headroom on v7x (64 MiB physical VMEM); v5e/v6e have
            # 128 MiB and can keep whole-layer bf16 weights resident comfortably.
            vmem_limit_bytes=48 * 1024 * 1024,
        ),
    )(inputs_embeds, attn_bias, kp['wqkv'], kp['wo'], kp['w1'], kp['w2'], kp['vecs'])


def reference_encoder(x, attention_mask, head_mask, params):
    """Pure-JAX f32 reference with HF DistilBERT semantics (eval mode)."""
    B_, S_, D_ = x.shape
    L = params['wq'].shape[0]
    mask_add = (1.0 - attention_mask) * jnp.finfo(jnp.float32).min     # (B, S)

    def ln(t, g, b):
        mu = t.mean(-1, keepdims=True)
        var = ((t - mu) ** 2).mean(-1, keepdims=True)
        return (t - mu) / jnp.sqrt(var + LN_EPS) * g + b

    h = x
    for l in range(L):
        q = h @ params['wq'][l] + params['bq'][l]
        k = h @ params['wk'][l] + params['bk'][l]
        v = h @ params['wv'][l] + params['bv'][l]

        def split(t):
            return t.reshape(B_, S_, N_HEADS, DH).transpose(0, 2, 1, 3)

        qh, kh, vh = split(q), split(k), split(v)
        scores = jnp.einsum('bhqd,bhkd->bhqk', qh, kh) * ATTN_SCALE
        scores = scores + mask_add[:, None, None, :]
        p = jax.nn.softmax(scores, axis=-1)
        p = p * head_mask[l][None, :, None, None]          # HF applies head_mask to probs
        ctx = jnp.einsum('bhqk,bhkd->bhqd', p, vh)
        ctx = ctx.transpose(0, 2, 1, 3).reshape(B_, S_, D_)
        attn = ctx @ params['wo'][l] + params['bo'][l]
        sa = ln(attn + h, params['ln1g'][l], params['ln1b'][l])
        hid = sa @ params['w1'][l] + params['b1'][l]
        hid = 0.5 * hid * (1.0 + lax.erf(hid * (1.0 / math.sqrt(2.0))))
        ffn = hid @ params['w2'][l] + params['b2'][l]
        h = ln(ffn + sa, params['ln2g'][l], params['ln2b'][l])
    return h


def init_params(key):
    ks = jax.random.split(key, 6)
    std = 0.02

    def w(k, shape):
        return (std * jax.random.normal(k, shape)).astype(jnp.float32)

    L = N_LAYERS
    return {
        # attention projections, (in_features, out_features) orientation
        'wq': w(ks[0], (L, DIM, DIM)), 'bq': jnp.zeros((L, DIM), jnp.float32),
        'wk': w(ks[1], (L, DIM, DIM)), 'bk': jnp.zeros((L, DIM), jnp.float32),
        'wv': w(ks[2], (L, DIM, DIM)), 'bv': jnp.zeros((L, DIM), jnp.float32),
        'wo': w(ks[3], (L, DIM, DIM)), 'bo': jnp.zeros((L, DIM), jnp.float32),
        # sa_layer_norm
        'ln1g': jnp.ones((L, DIM), jnp.float32),
        'ln1b': jnp.zeros((L, DIM), jnp.float32),
        # FFN
        'w1': w(ks[4], (L, DIM, HIDDEN)), 'b1': jnp.zeros((L, HIDDEN), jnp.float32),
        'w2': w(ks[5], (L, HIDDEN, DIM)), 'b2': jnp.zeros((L, DIM), jnp.float32),
        # output_layer_norm
        'ln2g': jnp.ones((L, DIM), jnp.float32),
        'ln2b': jnp.zeros((L, DIM), jnp.float32),
    }


if __name__ == "__main__":
    key = jax.random.PRNGKey(0)
    k_x, k_p = jax.random.split(key)

    inputs_embeds = jax.random.normal(k_x, (B, S, DIM), dtype=jnp.float32)
    attention_mask = jnp.ones((B, S), dtype=jnp.float32).at[1, 6:].set(0.0)  # pad 2 tokens
    head_mask = jnp.ones((N_LAYERS, N_HEADS), dtype=jnp.float32).at[1, 2].set(0.0)
    params = init_params(k_p)

    # Reference BEFORE the kernel call (inputs_embeds is donated to the kernel).
    ref = jax.block_until_ready(
        reference_encoder(inputs_embeds, attention_mask, head_mask, params))

    out = distilbert_encoder(inputs_embeds, attention_mask, head_mask, params,
                             batch_splits=1)
    out = jax.block_until_ready(out)

    assert out.shape == (B, S, DIM)
    assert bool(jnp.all(jnp.isfinite(out)))
    err = float(jnp.max(jnp.abs(out - ref)))
    assert err < 5e-2, f"max abs error vs reference: {err}"
    print("KERNEL_OK")
</pallas_src>

<mosaic_0001>
module attributes {stable_mosaic.version = 11 : i64} {
  func.func @transformer_layer_kernel(%arg0: i32, %arg1: i32, %arg2: memref<2x8x32xf32, #tpu.memory_space<vmem>>, %arg3: memref<2x1x8xf32, #tpu.memory_space<vmem>>, %arg4: memref<1x32x96xbf16, #tpu.memory_space<vmem>>, %arg5: memref<1x32x32xbf16, #tpu.memory_space<vmem>>, %arg6: memref<1x32x128xbf16, #tpu.memory_space<vmem>>, %arg7: memref<1x128x32xbf16, #tpu.memory_space<vmem>>, %arg8: memref<1x8x128xf32, #tpu.memory_space<vmem>>, %arg9: memref<2x8x32xf32, #tpu.memory_space<vmem>>) attributes {dimension_semantics = [#tpu.dimension_semantics<parallel>, #tpu.dimension_semantics<arbitrary>], iteration_bounds = array<i64: 1, 2>, scalar_prefetch = 0 : i64, scratch_operands = 0 : i64, tpu.core_type = #tpu.core_type<tc>, window_params = [{transform_indices = @transform_0, window_bounds = array<i64: 2, 8, 32>}, {transform_indices = @transform_1, window_bounds = array<i64: 2, 1, 8>}, {transform_indices = @transform_2, window_bounds = array<i64: 1, 32, 96>}, {transform_indices = @transform_3, window_bounds = array<i64: 1, 32, 32>}, {transform_indices = @transform_4, window_bounds = array<i64: 1, 32, 128>}, {transform_indices = @transform_5, window_bounds = array<i64: 1, 128, 32>}, {transform_indices = @transform_6, window_bounds = array<i64: 1, 8, 128>}, {transform_indices = @transform_7, window_bounds = array<i64: 2, 8, 32>}]} {
    %c0_i32 = arith.constant 0 : i32
    %0 = arith.cmpi eq, %arg1, %c0_i32 : i32
    %1 = arith.extui %0 : i1 to i32
    %c0_i32_0 = arith.constant 0 : i32
    %2 = arith.cmpi ne, %1, %c0_i32_0 : i32
    scf.if %2 {
      %c0_44 = arith.constant 0 : index
      %c0_45 = arith.constant 0 : index
      %c0_46 = arith.constant 0 : index
      %163 = vector.load %arg2[%c0_44, %c0_45, %c0_46] : memref<2x8x32xf32, #tpu.memory_space<vmem>>, vector<2x8x32xf32>
      %c0_47 = arith.constant 0 : index
      %c0_48 = arith.constant 0 : index
      %c0_49 = arith.constant 0 : index
      %164 = vector.load %arg9[%c0_47, %c0_48, %c0_49] : memref<2x8x32xf32, #tpu.memory_space<vmem>>, vector<2x8x32xf32>
      tpu.vector_store %arg9[%c0_47, %c0_48, %c0_49], %163 {strides = array<i32>} : memref<2x8x32xf32, #tpu.memory_space<vmem>>, vector<2x8x32xf32>,
    } else {
    }
    %c0 = arith.constant 0 : index
    %c0_1 = arith.constant 0 : index
    %c0_2 = arith.constant 0 : index
    %3 = vector.load %arg9[%c0, %c0_1, %c0_2] : memref<2x8x32xf32, #tpu.memory_space<vmem>>, vector<2x8x32xf32>
    %4 = vector.shape_cast %3 : vector<2x8x32xf32> to vector<16x32xf32>
    %5 = arith.truncf %4 : vector<16x32xf32> to vector<16x32xbf16>
    %c0_3 = arith.constant 0 : index
    %c0_4 = arith.constant 0 : index
    %c0_5 = arith.constant 0 : index
    %6 = vector.load %arg8[%c0_3, %c0_4, %c0_5] : memref<1x8x128xf32, #tpu.memory_space<vmem>>, vector<1x8x128xf32>
    %7 = vector.shape_cast %6 : vector<1x8x128xf32> to vector<8x128xf32>
    %8 = vector.extract_strided_slice %7 {offsets = [0, 0], sizes = [1, 96], strides = [1, 1]} : vector<8x128xf32> to vector<1x96xf32>
    %9 = vector.extract_strided_slice %7 {offsets = [1, 0], sizes = [1, 32], strides = [1, 1]} : vector<8x128xf32> to vector<1x32xf32>
    %10 = vector.extract_strided_slice %7 {offsets = [2, 0], sizes = [1, 32], strides = [1, 1]} : vector<8x128xf32> to vector<1x32xf32>
    %11 = vector.extract_strided_slice %7 {offsets = [3, 0], sizes = [1, 32], strides = [1, 1]} : vector<8x128xf32> to vector<1x32xf32>
    %12 = vector.extract_strided_slice %7 {offsets = [4, 0], sizes = [1, 128], strides = [1, 1]} : vector<8x128xf32> to vector<1x128xf32>
    %13 = vector.extract_strided_slice %7 {offsets = [5, 0], sizes = [1, 32], strides = [1, 1]} : vector<8x128xf32> to vector<1x32xf32>
    %14 = vector.extract_strided_slice %7 {offsets = [6, 0], sizes = [1, 32], strides = [1, 1]} : vector<8x128xf32> to vector<1x32xf32>
    %15 = vector.extract_strided_slice %7 {offsets = [7, 0], sizes = [1, 32], strides = [1, 1]} : vector<8x128xf32> to vector<1x32xf32>
    %c0_6 = arith.constant 0 : index
    %c0_7 = arith.constant 0 : index
    %c0_8 = arith.constant 0 : index
    %16 = vector.load %arg4[%c0_6, %c0_7, %c0_8] : memref<1x32x96xbf16, #tpu.memory_space<vmem>>, vector<1x32x96xbf16>
    %17 = vector.shape_cast %16 : vector<1x32x96xbf16> to vector<32x96xbf16>
    %cst = arith.constant dense<0.000000e+00> : vector<16x96xf32>
    %18 = tpu.matmul %5, %17, %cst {dimension_numbers = #tpu.dot_dimension_numbers<[1], [0], [0], [1], [0, 0, 1, 1], [], []>} : vector<16x32xbf16>, vector<32x96xbf16>, vector<16x96xf32> -> vector<16x96xf32>
    %19 = vector.broadcast %8 : vector<1x96xf32> to vector<16x96xf32>
    %20 = arith.addf %18, %19 : vector<16x96xf32>
    %21 = arith.truncf %20 : vector<16x96xf32> to vector<16x96xbf16>
    %22 = vector.extract_strided_slice %21 {offsets = [0, 0], sizes = [16, 32], strides = [1, 1]} : vector<16x96xbf16> to vector<16x32xbf16>
    %23 = vector.shape_cast %22 : vector<16x32xbf16> to vector<2x8x32xbf16>
    %24 = vector.extract_strided_slice %23 {offsets = [0, 0, 0], sizes = [2, 8, 8], strides = [1, 1, 1]} : vector<2x8x32xbf16> to vector<2x8x8xbf16>
    %25 = vector.extract_strided_slice %23 {offsets = [0, 0, 8], sizes = [2, 8, 8], strides = [1, 1, 1]} : vector<2x8x32xbf16> to vector<2x8x8xbf16>
    %26 = vector.extract_strided_slice %23 {offsets = [0, 0, 16], sizes = [2, 8, 8], strides = [1, 1, 1]} : vector<2x8x32xbf16> to vector<2x8x8xbf16>
    %27 = vector.extract_strided_slice %23 {offsets = [0, 0, 24], sizes = [2, 8, 8], strides = [1, 1, 1]} : vector<2x8x32xbf16> to vector<2x8x8xbf16>
    %28 = vector.shape_cast %24 : vector<2x8x8xbf16> to vector<1x2x8x8xbf16>
    %29 = vector.shape_cast %25 : vector<2x8x8xbf16> to vector<1x2x8x8xbf16>
    %30 = vector.shape_cast %26 : vector<2x8x8xbf16> to vector<1x2x8x8xbf16>
    %31 = vector.shape_cast %27 : vector<2x8x8xbf16> to vector<1x2x8x8xbf16>
    %32 = tpu.concatenate %28, %29, %30, %31 in 0 : vector<1x2x8x8xbf16>, vector<1x2x8x8xbf16>, vector<1x2x8x8xbf16>, vector<1x2x8x8xbf16> -> vector<4x2x8x8xbf16>
    %33 = vector.shape_cast %32 : vector<4x2x8x8xbf16> to vector<8x8x8xbf16>
    %34 = vector.extract_strided_slice %21 {offsets = [0, 32], sizes = [16, 32], strides = [1, 1]} : vector<16x96xbf16> to vector<16x32xbf16>
    %35 = vector.shape_cast %34 : vector<16x32xbf16> to vector<2x8x32xbf16>
    %36 = vector.extract_strided_slice %35 {offsets = [0, 0, 0], sizes = [2, 8, 8], strides = [1, 1, 1]} : vector<2x8x32xbf16> to vector<2x8x8xbf16>
    %37 = vector.extract_strided_slice %35 {offsets = [0, 0, 8], sizes = [2, 8, 8], strides = [1, 1, 1]} : vector<2x8x32xbf16> to vector<2x8x8xbf16>
    %38 = vector.extract_strided_slice %35 {offsets = [0, 0, 16], sizes = [2, 8, 8], strides = [1, 1, 1]} : vector<2x8x32xbf16> to vector<2x8x8xbf16>
    %39 = vector.extract_strided_slice %35 {offsets = [0, 0, 24], sizes = [2, 8, 8], strides = [1, 1, 1]} : vector<2x8x32xbf16> to vector<2x8x8xbf16>
    %40 = vector.shape_cast %36 : vector<2x8x8xbf16> to vector<1x2x8x8xbf16>
    %41 = vector.shape_cast %37 : vector<2x8x8xbf16> to vector<1x2x8x8xbf16>
    %42 = vector.shape_cast %38 : vector<2x8x8xbf16> to vector<1x2x8x8xbf16>
    %43 = vector.shape_cast %39 : vector<2x8x8xbf16> to vector<1x2x8x8xbf16>
    %44 = tpu.concatenate %40, %41, %42, %43 in 0 : vector<1x2x8x8xbf16>, vector<1x2x8x8xbf16>, vector<1x2x8x8xbf16>, vector<1x2x8x8xbf16> -> vector<4x2x8x8xbf16>
    %45 = vector.shape_cast %44 : vector<4x2x8x8xbf16> to vector<8x8x8xbf16>
    %46 = vector.extract_strided_slice %21 {offsets = [0, 64], sizes = [16, 32], strides = [1, 1]} : vector<16x96xbf16> to vector<16x32xbf16>
    %47 = vector.shape_cast %46 : vector<16x32xbf16> to vector<2x8x32xbf16>
    %48 = vector.extract_strided_slice %47 {offsets = [0, 0, 0], sizes = [2, 8, 8], strides = [1, 1, 1]} : vector<2x8x32xbf16> to vector<2x8x8xbf16>
    %49 = vector.extract_strided_slice %47 {offsets = [0, 0, 8], sizes = [2, 8, 8], strides = [1, 1, 1]} : vector<2x8x32xbf16> to vector<2x8x8xbf16>
    %50 = vector.extract_strided_slice %47 {offsets = [0, 0, 16], sizes = [2, 8, 8], strides = [1, 1, 1]} : vector<2x8x32xbf16> to vector<2x8x8xbf16>
    %51 = vector.extract_strided_slice %47 {offsets = [0, 0, 24], sizes = [2, 8, 8], strides = [1, 1, 1]} : vector<2x8x32xbf16> to vector<2x8x8xbf16>
    %52 = vector.shape_cast %48 : vector<2x8x8xbf16> to vector<1x2x8x8xbf16>
    %53 = vector.shape_cast %49 : vector<2x8x8xbf16> to vector<1x2x8x8xbf16>
    %54 = vector.shape_cast %50 : vector<2x8x8xbf16> to vector<1x2x8x8xbf16>
    %55 = vector.shape_cast %51 : vector<2x8x8xbf16> to vector<1x2x8x8xbf16>
    %56 = tpu.concatenate %52, %53, %54, %55 in 0 : vector<1x2x8x8xbf16>, vector<1x2x8x8xbf16>, vector<1x2x8x8xbf16>, vector<1x2x8x8xbf16> -> vector<4x2x8x8xbf16>
    %57 = vector.shape_cast %56 : vector<4x2x8x8xbf16> to vector<8x8x8xbf16>
    "tpu.trace_start"() <{level = 10 : i32, message = "nqd,nkd->nqk"}> : () -> ()
    %cst_9 = arith.constant dense<0.000000e+00> : vector<8x8x8xf32>
    %58 = tpu.matmul %33, %45, %cst_9 {dimension_numbers = #tpu.dot_dimension_numbers<[2], [2], [1], [1], [0, 0, 0, 1, 1, 1], [0], [0]>} : vector<8x8x8xbf16>, vector<8x8x8xbf16>, vector<8x8x8xf32> -> vector<8x8x8xf32>
    "tpu.trace_stop"() : () -> ()
    %c0_10 = arith.constant 0 : index
    %c0_11 = arith.constant 0 : index
    %c0_12 = arith.constant 0 : index
    %59 = vector.load %arg3[%c0_10, %c0_11, %c0_12] : memref<2x1x8xf32, #tpu.memory_space<vmem>>, vector<2x1x8xf32>
    %60 = tpu.concatenate %59, %59, %59, %59 in 0 : vector<2x1x8xf32>, vector<2x1x8xf32>, vector<2x1x8xf32>, vector<2x1x8xf32> -> vector<8x1x8xf32>
    %61 = vector.broadcast %60 : vector<8x1x8xf32> to vector<8x8x8xf32>
    %62 = arith.addf %58, %61 : vector<8x8x8xf32>
    %cst_13 = arith.constant dense<0xFF800000> : vector<8x8xf32>
    %63 = vector.multi_reduction <maximumf>, %62, %cst_13 [2] : vector<8x8x8xf32> to vector<8x8xf32>
    %64 = vector.shape_cast %63 : vector<8x8xf32> to vector<8x8x1xf32>
    %65 = vector.broadcast %64 : vector<8x8x1xf32> to vector<8x8x8xf32>
    %66 = arith.subf %62, %65 : vector<8x8x8xf32>
    %67 = math.exp %66 : vector<8x8x8xf32>
    %cst_14 = arith.constant dense<0.000000e+00> : vector<8x8xf32>
    %68 = vector.multi_reduction <add>, %67, %cst_14 [2] : vector<8x8x8xf32> to vector<8x8xf32>
    %69 = vector.shape_cast %68 : vector<8x8xf32> to vector<8x8x1xf32>
    %70 = tpu.reciprocal %69 {approx = true} : vector<8x8x1xf32> -> vector<8x8x1xf32>
    %71 = vector.broadcast %70 : vector<8x8x1xf32> to vector<8x8x8xf32>
    %72 = arith.mulf %67, %71 : vector<8x8x8xf32>
    %73 = arith.truncf %72 : vector<8x8x8xf32> to vector<8x8x8xbf16>
    "tpu.trace_start"() <{level = 10 : i32, message = "nqk,nkd->nqd"}> : () -> ()
    %cst_15 = arith.constant dense<0.000000e+00> : vector<8x8x8xf32>
    %74 = tpu.matmul %73, %57, %cst_15 {dimension_numbers = #tpu.dot_dimension_numbers<[2], [1], [1], [2], [0, 0, 0, 1, 1, 2], [0], [0]>} : vector<8x8x8xbf16>, vector<8x8x8xbf16>, vector<8x8x8xf32> -> vector<8x8x8xf32>
    "tpu.trace_stop"() : () -> ()
    %75 = arith.truncf %74 : vector<8x8x8xf32> to vector<8x8x8xbf16>
    %76 = vector.shape_cast %75 : vector<8x8x8xbf16> to vector<4x2x8x8xbf16>
    %77 = vector.extract_strided_slice %76 {offsets = [0, 0, 0, 0], sizes = [1, 2, 8, 8], strides = [1, 1, 1, 1]} : vector<4x2x8x8xbf16> to vector<1x2x8x8xbf16>
    %78 = vector.shape_cast %77 : vector<1x2x8x8xbf16> to vector<2x8x8xbf16>
    %79 = vector.shape_cast %78 : vector<2x8x8xbf16> to vector<16x8xbf16>
    %80 = vector.extract_strided_slice %76 {offsets = [1, 0, 0, 0], sizes = [1, 2, 8, 8], strides = [1, 1, 1, 1]} : vector<4x2x8x8xbf16> to vector<1x2x8x8xbf16>
    %81 = vector.shape_cast %80 : vector<1x2x8x8xbf16> to vector<2x8x8xbf16>
    %82 = vector.shape_cast %81 : vector<2x8x8xbf16> to vector<16x8xbf16>
    %83 = vector.extract_strided_slice %76 {offsets = [2, 0, 0, 0], sizes = [1, 2, 8, 8], strides = [1, 1, 1, 1]} : vector<4x2x8x8xbf16> to vector<1x2x8x8xbf16>
    %84 = vector.shape_cast %83 : vector<1x2x8x8xbf16> to vector<2x8x8xbf16>
    %85 = vector.shape_cast %84 : vector<2x8x8xbf16> to vector<16x8xbf16>
    %86 = vector.extract_strided_slice %76 {offsets = [3, 0, 0, 0], sizes = [1, 2, 8, 8], strides = [1, 1, 1, 1]} : vector<4x2x8x8xbf16> to vector<1x2x8x8xbf16>
    %87 = vector.shape_cast %86 : vector<1x2x8x8xbf16> to vector<2x8x8xbf16>
    %88 = vector.shape_cast %87 : vector<2x8x8xbf16> to vector<16x8xbf16>
    %89 = tpu.concatenate %79, %82, %85, %88 in 1 : vector<16x8xbf16>, vector<16x8xbf16>, vector<16x8xbf16>, vector<16x8xbf16> -> vector<16x32xbf16>
    %c0_16 = arith.constant 0 : index
    %c0_17 = arith.constant 0 : index
    %c0_18 = arith.constant 0 : index
    %90 = vector.load %arg5[%c0_16, %c0_17, %c0_18] : memref<1x32x32xbf16, #tpu.memory_space<vmem>>, vector<1x32x32xbf16>
    %91 = vector.shape_cast %90 : vector<1x32x32xbf16> to vector<32x32xbf16>
    %cst_19 = arith.constant dense<0.000000e+00> : vector<16x32xf32>
    %92 = tpu.matmul %89, %91, %cst_19 {dimension_numbers = #tpu.dot_dimension_numbers<[1], [0], [0], [1], [0, 0, 1, 1], [], []>} : vector<16x32xbf16>, vector<32x32xbf16>, vector<16x32xf32> -> vector<16x32xf32>
    %93 = vector.broadcast %9 : vector<1x32xf32> to vector<16x32xf32>
    %94 = arith.addf %92, %93 : vector<16x32xf32>
    %95 = arith.addf %94, %4 : vector<16x32xf32>
    %cst_20 = arith.constant dense<0.000000e+00> : vector<16xf32>
    %96 = vector.multi_reduction <add>, %95, %cst_20 [1] : vector<16x32xf32> to vector<16xf32>
    %97 = vector.shape_cast %96 : vector<16xf32> to vector<16x1xf32>
    %cst_21 = arith.constant 3.200000e+01 : f32
    %98 = vector.broadcast %cst_21 : f32 to vector<16x1xf32>
    %99 = arith.divf %97, %98 : vector<16x1xf32>
    %100 = vector.broadcast %99 : vector<16x1xf32> to vector<16x32xf32>
    %101 = arith.subf %95, %100 : vector<16x32xf32>
    %102 = arith.mulf %101, %101 : vector<16x32xf32>
    %cst_22 = arith.constant dense<0.000000e+00> : vector<16xf32>
    %103 = vector.multi_reduction <add>, %102, %cst_22 [1] : vector<16x32xf32> to vector<16xf32>
    %104 = vector.shape_cast %103 : vector<16xf32> to vector<16x1xf32>
    %cst_23 = arith.constant 3.200000e+01 : f32
    %105 = vector.broadcast %cst_23 : f32 to vector<16x1xf32>
    %106 = arith.divf %104, %105 : vector<16x1xf32>
    %107 = vector.broadcast %99 : vector<16x1xf32> to vector<16x32xf32>
    %108 = arith.subf %95, %107 : vector<16x32xf32>
    %cst_24 = arith.constant 9.99999996E-13 : f32
    %109 = vector.broadcast %cst_24 : f32 to vector<16x1xf32>
    %110 = arith.addf %106, %109 : vector<16x1xf32>
    %111 = math.rsqrt %110 : vector<16x1xf32>
    %112 = vector.broadcast %111 : vector<16x1xf32> to vector<16x32xf32>
    %113 = arith.mulf %108, %112 : vector<16x32xf32>
    %114 = vector.broadcast %10 : vector<1x32xf32> to vector<16x32xf32>
    %115 = arith.mulf %113, %114 : vector<16x32xf32>
    %116 = vector.broadcast %11 : vector<1x32xf32> to vector<16x32xf32>
    %117 = arith.addf %115, %116 : vector<16x32xf32>
    %118 = arith.truncf %117 : vector<16x32xf32> to vector<16x32xbf16>
    %c0_25 = arith.constant 0 : index
    %c0_26 = arith.constant 0 : index
    %c0_27 = arith.constant 0 : index
    %119 = vector.load %arg6[%c0_25, %c0_26, %c0_27] : memref<1x32x128xbf16, #tpu.memory_space<vmem>>, vector<1x32x128xbf16>
    %120 = vector.shape_cast %119 : vector<1x32x128xbf16> to vector<32x128xbf16>
    %cst_28 = arith.constant dense<0.000000e+00> : vector<16x128xf32>
    %121 = tpu.matmul %118, %120, %cst_28 {dimension_numbers = #tpu.dot_dimension_numbers<[1], [0], [0], [1], [0, 0, 1, 1], [], []>} : vector<16x32xbf16>, vector<32x128xbf16>, vector<16x128xf32> -> vector<16x128xf32>
    %122 = vector.broadcast %12 : vector<1x128xf32> to vector<16x128xf32>
    %123 = arith.addf %121, %122 : vector<16x128xf32>
    %cst_29 = arith.constant 5.000000e-01 : f32
    %124 = vector.broadcast %cst_29 : f32 to vector<16x128xf32>
    %125 = arith.mulf %124, %123 : vector<16x128xf32>
    %cst_30 = arith.constant 0.707106769 : f32
    %126 = vector.broadcast %cst_30 : f32 to vector<16x128xf32>
    %127 = arith.mulf %123, %126 : vector<16x128xf32>
    %128 = math.erf %127 : vector<16x128xf32>
    %cst_31 = arith.constant 1.000000e+00 : f32
    %129 = vector.broadcast %cst_31 : f32 to vector<16x128xf32>
    %130 = arith.addf %129, %128 : vector<16x128xf32>
    %131 = arith.mulf %125, %130 : vector<16x128xf32>
    %132 = arith.truncf %131 : vector<16x128xf32> to vector<16x128xbf16>
    %c0_32 = arith.constant 0 : index
    %c0_33 = arith.constant 0 : index
    %c0_34 = arith.constant 0 : index
    %133 = vector.load %arg7[%c0_32, %c0_33, %c0_34] : memref<1x128x32xbf16, #tpu.memory_space<vmem>>, vector<1x128x32xbf16>
    %134 = vector.shape_cast %133 : vector<1x128x32xbf16> to vector<128x32xbf16>
    %cst_35 = arith.constant dense<0.000000e+00> : vector<16x32xf32>
    %135 = tpu.matmul %132, %134, %cst_35 {dimension_numbers = #tpu.dot_dimension_numbers<[1], [0], [0], [1], [0, 0, 1, 1], [], []>} : vector<16x128xbf16>, vector<128x32xbf16>, vector<16x32xf32> -> vector<16x32xf32>
    %136 = vector.broadcast %13 : vector<1x32xf32> to vector<16x32xf32>
    %137 = arith.addf %135, %136 : vector<16x32xf32>
    %138 = arith.addf %137, %117 : vector<16x32xf32>
    %cst_36 = arith.constant dense<0.000000e+00> : vector<16xf32>
    %139 = vector.multi_reduction <add>, %138, %cst_36 [1] : vector<16x32xf32> to vector<16xf32>
    %140 = vector.shape_cast %139 : vector<16xf32> to vector<16x1xf32>
    %cst_37 = arith.constant 3.200000e+01 : f32
    %141 = vector.broadcast %cst_37 : f32 to vector<16x1xf32>
    %142 = arith.divf %140, %141 : vector<16x1xf32>
    %143 = vector.broadcast %142 : vector<16x1xf32> to vector<16x32xf32>
    %144 = arith.subf %138, %143 : vector<16x32xf32>
    %145 = arith.mulf %144, %144 : vector<16x32xf32>
    %cst_38 = arith.constant dense<0.000000e+00> : vector<16xf32>
    %146 = vector.multi_reduction <add>, %145, %cst_38 [1] : vector<16x32xf32> to vector<16xf32>
    %147 = vector.shape_cast %146 : vector<16xf32> to vector<16x1xf32>
    %cst_39 = arith.constant 3.200000e+01 : f32
    %148 = vector.broadcast %cst_39 : f32 to vector<16x1xf32>
    %149 = arith.divf %147, %148 : vector<16x1xf32>
    %150 = vector.broadcast %142 : vector<16x1xf32> to vector<16x32xf32>
    %151 = arith.subf %138, %150 : vector<16x32xf32>
    %cst_40 = arith.constant 9.99999996E-13 : f32
    %152 = vector.broadcast %cst_40 : f32 to vector<16x1xf32>
    %153 = arith.addf %149, %152 : vector<16x1xf32>
    %154 = math.rsqrt %153 : vector<16x1xf32>
    %155 = vector.broadcast %154 : vector<16x1xf32> to vector<16x32xf32>
    %156 = arith.mulf %151, %155 : vector<16x32xf32>
    %157 = vector.broadcast %14 : vector<1x32xf32> to vector<16x32xf32>
    %158 = arith.mulf %156, %157 : vector<16x32xf32>
    %159 = vector.broadcast %15 : vector<1x32xf32> to vector<16x32xf32>
    %160 = arith.addf %158, %159 : vector<16x32xf32>
    %161 = vector.shape_cast %160 : vector<16x32xf32> to vector<2x8x32xf32>
    %c0_41 = arith.constant 0 : index
    %c0_42 = arith.constant 0 : index
    %c0_43 = arith.constant 0 : index
    %162 = vector.load %arg9[%c0_41, %c0_42, %c0_43] : memref<2x8x32xf32, #tpu.memory_space<vmem>>, vector<2x8x32xf32>
    tpu.vector_store %arg9[%c0_41, %c0_42, %c0_43], %161 {strides = array<i32>} : memref<2x8x32xf32, #tpu.memory_space<vmem>>, vector<2x8x32xf32>,
    return
  }
  func.func @transform_0(%arg0: i32, %arg1: i32) -> (i32, i32, i32) {
    %c0_i32 = arith.constant 0 : i32
    %c0_i32_0 = arith.constant 0 : i32
    %c0_i32_1 = arith.constant 0 : i32
    return %arg0, %c0_i32, %c0_i32_0 : i32, i32, i32
  }
  func.func @transform_1(%arg0: i32, %arg1: i32) -> (i32, i32, i32) {
    %c0_i32 = arith.constant 0 : i32
    %c0_i32_0 = arith.constant 0 : i32
    %c0_i32_1 = arith.constant 0 : i32
    return %arg0, %c0_i32, %c0_i32_0 : i32, i32, i32
  }
  func.func @transform_2(%arg0: i32, %arg1: i32) -> (i32, i32, i32) {
    %c0_i32 = arith.constant 0 : i32
    %c0_i32_0 = arith.constant 0 : i32
    %c0_i32_1 = arith.constant 0 : i32
    return %arg1, %c0_i32, %c0_i32_0 : i32, i32, i32
  }
  func.func @transform_3(%arg0: i32, %arg1: i32) -> (i32, i32, i32) {
    %c0_i32 = arith.constant 0 : i32
    %c0_i32_0 = arith.constant 0 : i32
    %c0_i32_1 = arith.constant 0 : i32
    return %arg1, %c0_i32, %c0_i32_0 : i32, i32, i32
  }
  func.func @transform_4(%arg0: i32, %arg1: i32) -> (i32, i32, i32) {
    %c0_i32 = arith.constant 0 : i32
    %c0_i32_0 = arith.constant 0 : i32
    %c0_i32_1 = arith.constant 0 : i32
    return %arg1, %c0_i32, %c0_i32_0 : i32, i32, i32
  }
  func.func @transform_5(%arg0: i32, %arg1: i32) -> (i32, i32, i32) {
    %c0_i32 = arith.constant 0 : i32
    %c0_i32_0 = arith.constant 0 : i32
    %c0_i32_1 = arith.constant 0 : i32
    return %arg1, %c0_i32, %c0_i32_0 : i32, i32, i32
  }
  func.func @transform_6(%arg0: i32, %arg1: i32) -> (i32, i32, i32) {
    %c0_i32 = arith.constant 0 : i32
    %c0_i32_0 = arith.constant 0 : i32
    %c0_i32_1 = arith.constant 0 : i32
    return %arg1, %c0_i32, %c0_i32_0 : i32, i32, i32
  }
  func.func @transform_7(%arg0: i32, %arg1: i32) -> (i32, i32, i32) {
    %c0_i32 = arith.constant 0 : i32
    %c0_i32_0 = arith.constant 0 : i32
    %c0_i32_1 = arith.constant 0 : i32
    return %arg0, %c0_i32, %c0_i32_0 : i32, i32, i32
  }
}

</mosaic_0001>

<llo_original>
// kernel: tpu_custom_call.1
$region0: #{tpu_custom_call.1}
  #allocation0 [shape = 'u32[]', space=smem, size = 0x4, offset = 0x4, fixed_abs, tag = 'smem constant byte address 0x4 - core index']
  #allocation1 [shape = 'u32[72,128]{1,0:T(1,128)}', space=vmem, size = 0x9000, scoped, tag = 'internal scratch']
  %s0 = inlined_call_operand.hbm [shape: f32[2,8,32], index: 0, kind: input, shape index: {}, may-alias: {0,7}]
  %s1 = inlined_call_operand.vmem [shape: f32[2,1,8], index: 1, kind: input, shape index: {}]
  %s2 = inlined_call_operand.vmem [shape: bf16[2,32,96], index: 2, kind: input, shape index: {}]
  %s3 = inlined_call_operand.vmem [shape: bf16[2,32,32], index: 3, kind: input, shape index: {}]
  %s4 = inlined_call_operand.vmem [shape: bf16[2,32,128], index: 4, kind: input, shape index: {}]
  %s5 = inlined_call_operand.vmem [shape: bf16[2,128,32], index: 5, kind: input, shape index: {}]
  %s6 = inlined_call_operand.vmem [shape: f32[2,8,128], index: 6, kind: input, shape index: {}]
  %s7 = inlined_call_operand.hbm [shape: f32[2,8,32], index: 7, kind: output, shape index: {}, may-alias: {0,7}]
  %s8 = sld [smem:[#allocation0]]
  $region69: #{tpu_custom_call.1} parent=0
    _
  %s10 = ssub.s32 1, %s8
  %s11 = scalar_select 0, %s10, %s8
  $region1: #{tpu_custom_call.1} parent=0
    #allocation2 [shape = 'u8[8192]{0}', space=vmem, size = 0x2000, scoped, tag = 'input window, operand 0, single buffered']
    #allocation3 [shape = 's32[2]{0}', space=sflag, size = 0x8, scoped, tag = 'scoped memory for tpu_custom_call.1']
    #allocation4 [shape = 's32[2]{0}', space=sflag, size = 0x8, scoped, tag = 'scoped memory for tpu_custom_call.1']
    #allocation5 [shape = 'u8[8192]{0}', space=vmem, size = 0x2000, scoped, tag = 'output window, operand 0, single buffered']
    %12 = vsyncpa [#allocation3], 0
    %13 = vsyncpa [#allocation4], 0
    loop: start=0, step=1, limit=4
    $region2: #{tpu_custom_call.1} parent=1 // loop_pre_header
      _
    $region3: #{tpu_custom_call.1} parent=1 // loop_header
      %s15 = sphi 0, %s19
      %p16 = scmp.ge.s32.totalorder %s15, 4
      %s22 = sphi 0, %s34
      %s23 = sphi 0, %s30
      %s24 = sphi 0, %s22
      %s25 = sphi 0, %s23
      %s26 = sphi 0, %s24
      %s27 = sphi 0, %s25
      %s37 = sphi 0, %s39
      %s40 = sphi 0, %s37
      %s41 = sphi 0, %s40
      %s57 = sphi 0, %s41
      %s63 = sphi 0, %s65
      %s66 = sphi 0, %s63
      %s67 = sphi 0, %s66
      %s83 = sphi 0, %s67
      %s89 = sphi 0, %s91
      %s92 = sphi 0, %s89
      %s93 = sphi 0, %s92
      %s109 = sphi 0, %s93
      %s115 = sphi 0, %s117
      %s118 = sphi 0, %s115
      %s119 = sphi 0, %s118
      %s135 = sphi 0, %s119
      %s141 = sphi 0, %s143
      %s144 = sphi 0, %s141
      %s145 = sphi 0, %s144
      %s161 = sphi 0, %s145
      %s167 = sphi 0, %s169
      %s170 = sphi 0, %s167
      %s171 = sphi 0, %s170
      %s187 = sphi 0, %s171
      %s193 = sphi 0, %s195
      %s196 = sphi 0, %s193
      %s197 = sphi 0, %s196
      %s213 = sphi 0, %s197
      %s219 = sphi 0, %s221
      %s222 = sphi 0, %s219
      %s223 = sphi 0, %s222
      %s239 = sphi 0, %s223
    $region4: #{tpu_custom_call.1} parent=1 // loop_header_branch
      %18 = sbr.rel (%p16) target = $region8
    $region5: #{tpu_custom_call.1} parent=1 // loop_body
      %s20 = ssub.s32 %s15, 1
      %s21 = ssub.s32 %s15, 2
      %s28 = sadd.s32 1, %s23
      %p29 = scmp.ge.s32.totalorder %s28, 2
      %s30 = scalar_select %p29, 0, %s28
      %s31 = sadd.s32 1, %s22
      %s32 = scalar_select %p29, %s31, %s22
      %p33 = scmp.ge.s32.totalorder %s32, 1
      %s34 = scalar_select %p33, 0, %s32
      %s35 = ssub.s32 %s22, %s34
      %p36 = scmp.eq.s32.totalorder %s35, 0
      %s38 = sadd.s32 %s37, 1
      %s39 = scalar_select %p36, %s37, %s38
      %p42 = pneg %p36
      %p43 = scmp.eq.s32.totalorder %s15, 1
      %p44 = por %p42, %p43
      %p45 = scmp.ne.s32.totalorder %s37, %s40
      %p46 = scmp.eq.s32.totalorder %s15, 0
      %p47 = por %p45, %p46
      %p48 = scmp.ne.s32.totalorder %s37, %s40
      %p49 = scmp.eq.s32.totalorder %s20, 1
      %p50 = por %p48, %p49
      %p51 = scmp.ne.s32.totalorder %s40, %s41
      %p52 = scmp.eq.s32.totalorder %s20, 0
      %p53 = por %p51, %p52
      %p54 = scmp.ne.s32.totalorder %s40, %s41
      %p55 = scmp.eq.s32.totalorder %s21, 1
      %p56 = por %p54, %p55
      %p58 = scmp.ne.s32.totalorder %s41, %s57
      %p59 = scmp.eq.s32.totalorder %s21, 0
      %p60 = por %p58, %p59
      %s61 = ssub.s32 %s22, %s34
      %p62 = scmp.eq.s32.totalorder %s61, 0
      %s64 = sadd.s32 %s63, 1
      %s65 = scalar_select %p62, %s63, %s64
      %p68 = pneg %p62
      %p69 = scmp.eq.s32.totalorder %s15, 1
      %p70 = por %p68, %p69
      %p71 = scmp.ne.s32.totalorder %s63, %s66
      %p72 = scmp.eq.s32.totalorder %s15, 0
      %p73 = por %p71, %p72
      %p74 = scmp.ne.s32.totalorder %s63, %s66
      %p75 = scmp.eq.s32.totalorder %s20, 1
      %p76 = por %p74, %p75
      %p77 = scmp.ne.s32.totalorder %s66, %s67
      %p78 = scmp.eq.s32.totalorder %s20, 0
      %p79 = por %p77, %p78
      %p80 = scmp.ne.s32.totalorder %s66, %s67
      %p81 = scmp.eq.s32.totalorder %s21, 1
      %p82 = por %p80, %p81
      %p84 = scmp.ne.s32.totalorder %s67, %s83
      %p85 = scmp.eq.s32.totalorder %s21, 0
      %p86 = por %p84, %p85
      %s87 = ssub.s32 %s23, %s30
      %p88 = scmp.eq.s32.totalorder %s87, 0
      %s90 = sadd.s32 %s89, 1
      %s91 = scalar_select %p88, %s89, %s90
      %p94 = pneg %p88
      %p95 = scmp.eq.s32.totalorder %s15, 1
      %p96 = por %p94, %p95
      %p97 = scmp.ne.s32.totalorder %s89, %s92
      %p98 = scmp.eq.s32.totalorder %s15, 0
      %p99 = por %p97, %p98
      %p100 = scmp.ne.s32.totalorder %s89, %s92
      %p101 = scmp.eq.s32.totalorder %s20, 1
      %p102 = por %p100, %p101
      %p103 = scmp.ne.s32.totalorder %s92, %s93
      %p104 = scmp.eq.s32.totalorder %s20, 0
      %p105 = por %p103, %p104
      %p106 = scmp.ne.s32.totalorder %s92, %s93
      %p107 = scmp.eq.s32.totalorder %s21, 1
      %p108 = por %p106, %p107
      %p110 = scmp.ne.s32.totalorder %s93, %s109
      %p111 = scmp.eq.s32.totalorder %s21, 0
      %p112 = por %p110, %p111
      %s113 = ssub.s32 %s23, %s30
      %p114 = scmp.eq.s32.totalorder %s113, 0
      %s116 = sadd.s32 %s115, 1
      %s117 = scalar_select %p114, %s115, %s116
      %p120 = pneg %p114
      %p121 = scmp.eq.s32.totalorder %s15, 1
      %p122 = por %p120, %p121
      %p123 = scmp.ne.s32.totalorder %s115, %s118
      %p124 = scmp.eq.s32.totalorder %s15, 0
      %p125 = por %p123, %p124
      %p126 = scmp.ne.s32.totalorder %s115, %s118
      %p127 = scmp.eq.s32.totalorder %s20, 1
      %p128 = por %p126, %p127
      %p129 = scmp.ne.s32.totalorder %s118, %s119
      %p130 = scmp.eq.s32.totalorder %s20, 0
      %p131 = por %p129, %p130
      %p132 = scmp.ne.s32.totalorder %s118, %s119
      %p133 = scmp.eq.s32.totalorder %s21, 1
      %p134 = por %p132, %p133
      %p136 = scmp.ne.s32.totalorder %s119, %s135
      %p137 = scmp.eq.s32.totalorder %s21, 0
      %p138 = por %p136, %p137
      %s139 = ssub.s32 %s23, %s30
      %p140 = scmp.eq.s32.totalorder %s139, 0
      %s142 = sadd.s32 %s141, 1
      %s143 = scalar_select %p140, %s141, %s142
      %p146 = pneg %p140
      %p147 = scmp.eq.s32.totalorder %s15, 1
      %p148 = por %p146, %p147
      %p149 = scmp.ne.s32.totalorder %s141, %s144
      %p150 = scmp.eq.s32.totalorder %s15, 0
      %p151 = por %p149, %p150
      %p152 = scmp.ne.s32.totalorder %s141, %s144
      %p153 = scmp.eq.s32.totalorder %s20, 1
      %p154 = por %p152, %p153
      %p155 = scmp.ne.s32.totalorder %s144, %s145
      %p156 = scmp.eq.s32.totalorder %s20, 0
      %p157 = por %p155, %p156
      %p158 = scmp.ne.s32.totalorder %s144, %s145
      %p159 = scmp.eq.s32.totalorder %s21, 1
      %p160 = por %p158, %p159
      %p162 = scmp.ne.s32.totalorder %s145, %s161
      %p163 = scmp.eq.s32.totalorder %s21, 0
      %p164 = por %p162, %p163
      %s165 = ssub.s32 %s23, %s30
      %p166 = scmp.eq.s32.totalorder %s165, 0
      %s168 = sadd.s32 %s167, 1
      %s169 = scalar_select %p166, %s167, %s168
      %p172 = pneg %p166
      %p173 = scmp.eq.s32.totalorder %s15, 1
      %p174 = por %p172, %p173
      %p175 = scmp.ne.s32.totalorder %s167, %s170
      %p176 = scmp.eq.s32.totalorder %s15, 0
      %p177 = por %p175, %p176
      %p178 = scmp.ne.s32.totalorder %s167, %s170
      %p179 = scmp.eq.s32.totalorder %s20, 1
      %p180 = por %p178, %p179
      %p181 = scmp.ne.s32.totalorder %s170, %s171
      %p182 = scmp.eq.s32.totalorder %s20, 0
      %p183 = por %p181, %p182
      %p184 = scmp.ne.s32.totalorder %s170, %s171
      %p185 = scmp.eq.s32.totalorder %s21, 1
      %p186 = por %p184, %p185
      %p188 = scmp.ne.s32.totalorder %s171, %s187
      %p189 = scmp.eq.s32.totalorder %s21, 0
      %p190 = por %p188, %p189
      %s191 = ssub.s32 %s23, %s30
      %p192 = scmp.eq.s32.totalorder %s191, 0
      %s194 = sadd.s32 %s193, 1
      %s195 = scalar_select %p192, %s193, %s194
      %p198 = pneg %p192
      %p199 = scmp.eq.s32.totalorder %s15, 1
      %p200 = por %p198, %p199
      %p201 = scmp.ne.s32.totalorder %s193, %s196
      %p202 = scmp.eq.s32.totalorder %s15, 0
      %p203 = por %p201, %p202
      %p204 = scmp.ne.s32.totalorder %s193, %s196
      %p205 = scmp.eq.s32.totalorder %s20, 1
      %p206 = por %p204, %p205
      %p207 = scmp.ne.s32.totalorder %s196, %s197
      %p208 = scmp.eq.s32.totalorder %s20, 0
      %p209 = por %p207, %p208
      %p210 = scmp.ne.s32.totalorder %s196, %s197
      %p211 = scmp.eq.s32.totalorder %s21, 1
      %p212 = por %p210, %p211
      %p214 = scmp.ne.s32.totalorder %s197, %s213
      %p215 = scmp.eq.s32.totalorder %s21, 0
      %p216 = por %p214, %p215
      %s217 = ssub.s32 %s22, %s34
      %p218 = scmp.eq.s32.totalorder %s217, 0
      %s220 = sadd.s32 %s219, 1
      %s221 = scalar_select %p218, %s219, %s220
      %p224 = pneg %p218
      %p225 = scmp.eq.s32.totalorder %s15, 1
      %p226 = por %p224, %p225
      %p227 = scmp.ne.s32.totalorder %s219, %s222
      %p228 = scmp.eq.s32.totalorder %s15, 0
      %p229 = por %p227, %p228
      %p230 = scmp.ne.s32.totalorder %s219, %s222
      %p231 = scmp.eq.s32.totalorder %s20, 1
      %p232 = por %p230, %p231
      %p233 = scmp.ne.s32.totalorder %s222, %s223
      %p234 = scmp.eq.s32.totalorder %s20, 0
      %p235 = por %p233, %p234
      %p236 = scmp.ne.s32.totalorder %s222, %s223
      %p237 = scmp.eq.s32.totalorder %s21, 1
      %p238 = por %p236, %p237
      %p240 = scmp.ne.s32.totalorder %s223, %s239
      %p241 = scmp.eq.s32.totalorder %s21, 0
      %p242 = por %p240, %p241
      %p243 = scmp.le.s32.totalorder 1, %s15
      %p244 = scmp.lt.s32.totalorder %s15, 3
      %p245 = pnand %p243, %p244
      %p246 = pneg %p245
      // Predicated region
      $region9: #{tpu_custom_call.1} parent=5 // pred_check
        _
      $region10: #{tpu_custom_call.1} parent=5 // pred_check_branch
        %248 = sbr.rel (%p245) target = $region12
      $region11: #{tpu_custom_call.1} parent=5 // pred_region
        %s249 = ssub.s32 %s15, 1
        // Predicated region
        $region13: #{tpu_custom_call.1} parent=11 // pred_check
          %p250 = pneg %p53
        $region14: #{tpu_custom_call.1} parent=11 // pred_check_branch
          %252 = sbr.rel (%p250) target = $region16
        $region15: #{tpu_custom_call.1} parent=11 // pred_region
          %s253 = smul.u32 2, %s24
          %255 = vsyncadd [#allocation3], 0
          %s256 = smul.addr %s253, 8
          %s257 = scalar_lea.hbm %s0, %s256
          %s258 = sshll.u32 %s257, 4
          %s259 = int_to_ptr.hbm [resolvable:$true] %s258
          %s260 = sshll.u32 [#allocation2], 4
          %s261 = int_to_ptr.vmem [resolvable:$true] %s260
          %266 = dma.hbm_to_vmem [thread:$0]  %s259, 256, %s261, [#allocation3], 128, 128, 8
        $region16: #{tpu_custom_call.1} parent=11 // pred_fallthru
          _
        // Predicated region
        $region17: #{tpu_custom_call.1} parent=11 // pred_check
          %p267 = pneg %p79
        $region18: #{tpu_custom_call.1} parent=11 // pred_check_branch
          %269 = sbr.rel (%p267) target = $region20
        $region19: #{tpu_custom_call.1} parent=11 // pred_region
          %s270 = smul.u32 2, %s24
          %p271 = scmp.lt.s32.totalorder %s270, 1
          %s272 = scalar_select %p271, %s270, 1
          %s273 = scalar_lea.vmem %s1, %s272
          %s274 = smul.u32 2, %s24
        $region20: #{tpu_custom_call.1} parent=11 // pred_fallthru
          _
      $region12: #{tpu_custom_call.1} parent=5 // pred_fallthru
        _
      %p275 = scmp.lt.s32.totalorder %s15, 2
      // Predicated region
      $region21: #{tpu_custom_call.1} parent=5 // pred_check
        %p276 = pneg %p275
      $region22: #{tpu_custom_call.1} parent=5 // pred_check_branch
        %278 = sbr.rel (%p276) target = $region24
      $region23: #{tpu_custom_call.1} parent=5 // pred_region
        // Predicated region
        $region25: #{tpu_custom_call.1} parent=23 // pred_check
          %p279 = pneg %p99
        $region26: #{tpu_custom_call.1} parent=23 // pred_check_branch
          %281 = sbr.rel (%p279) target = $region28
        $region27: #{tpu_custom_call.1} parent=23 // pred_region
          %p282 = scmp.lt.s32.totalorder %s23, 1
          %s283 = scalar_select %p282, %s23, 1
          %s284 = smul.addr %s283, 4
          %s285 = smul.addr %s284, 4
          %s286 = scalar_lea.vmem %s2, %s285
        $region28: #{tpu_custom_call.1} parent=23 // pred_fallthru
          _
        // Predicated region
        $region29: #{tpu_custom_call.1} parent=23 // pred_check
          %p287 = pneg %p125
        $region30: #{tpu_custom_call.1} parent=23 // pred_check_branch
          %289 = sbr.rel (%p287) target = $region32
        $region31: #{tpu_custom_call.1} parent=23 // pred_region
          %p290 = scmp.lt.s32.totalorder %s23, 1
          %s291 = scalar_select %p290, %s23, 1
          %s292 = smul.addr %s291, 4
          %s293 = smul.addr %s292, 4
          %s294 = scalar_lea.vmem %s3, %s293
        $region32: #{tpu_custom_call.1} parent=23 // pred_fallthru
          _
        // Predicated region
        $region33: #{tpu_custom_call.1} parent=23 // pred_check
          %p295 = pneg %p151
        $region34: #{tpu_custom_call.1} parent=23 // pred_check_branch
          %297 = sbr.rel (%p295) target = $region36
        $region35: #{tpu_custom_call.1} parent=23 // pred_region
          %p298 = scmp.lt.s32.totalorder %s23, 1
          %s299 = scalar_select %p298, %s23, 1
          %s300 = smul.addr %s299, 4
          %s301 = smul.addr %s300, 4
          %s302 = scalar_lea.vmem %s4, %s301
        $region36: #{tpu_custom_call.1} parent=23 // pred_fallthru
          _
        // Predicated region
        $region37: #{tpu_custom_call.1} parent=23 // pred_check
          %p303 = pneg %p177
        $region38: #{tpu_custom_call.1} parent=23 // pred_check_branch
          %305 = sbr.rel (%p303) target = $region40
        $region39: #{tpu_custom_call.1} parent=23 // pred_region
          %p306 = scmp.lt.s32.totalorder %s23, 1
          %s307 = scalar_select %p306, %s23, 1
          %s308 = smul.addr %s307, 16
          %s309 = smul.addr %s308, 4
          %s310 = scalar_lea.vmem %s5, %s309
        $region40: #{tpu_custom_call.1} parent=23 // pred_fallthru
          _
        // Predicated region
        $region41: #{tpu_custom_call.1} parent=23 // pred_check
          %p311 = pneg %p203
        $region42: #{tpu_custom_call.1} parent=23 // pred_check_branch
          %313 = sbr.rel (%p311) target = $region44
        $region43: #{tpu_custom_call.1} parent=23 // pred_region
          %p314 = scmp.lt.s32.totalorder %s23, 1
          %s315 = scalar_select %p314, %s23, 1
          %s316 = smul.addr %s315, 8
          %s317 = scalar_lea.vmem %s6, %s316
        $region44: #{tpu_custom_call.1} parent=23 // pred_fallthru
          _
      $region24: #{tpu_custom_call.1} parent=5 // pred_fallthru
        _
      %p318 = scmp.le.s32.totalorder 1, %s15
      %p319 = scmp.lt.s32.totalorder %s15, 3
      %p320 = pnand %p318, %p319
      %p321 = pneg %p320
      // Predicated region
      $region45: #{tpu_custom_call.1} parent=5 // pred_check
        _
      $region46: #{tpu_custom_call.1} parent=5 // pred_check_branch
        %323 = sbr.rel (%p320) target = $region48
      $region47: #{tpu_custom_call.1} parent=5 // pred_region
        %s324 = ssub.s32 %s15, 1
        // Predicated region
        $region49: #{tpu_custom_call.1} parent=47 // pred_check
          %p325 = pneg %p53
        $region50: #{tpu_custom_call.1} parent=47 // pred_check_branch
          %327 = sbr.rel (%p325) target = $region52
        $region51: #{tpu_custom_call.1} parent=47 // pred_region
          %329 = dma.done [#allocation3], 256
        $region52: #{tpu_custom_call.1} parent=47 // pred_fallthru
          _
        %p330 = pneg %p53
        %p331 = pneg %p50
        %s332 = smul.u32 2, %s24
        %p333 = scmp.lt.s32.totalorder %s332, 1
        %s334 = scalar_select %p333, %s332, 1
        %s335 = scalar_lea.vmem %s1, %s334
        %p336 = pneg %p79
        %p337 = pneg %p76
        %p338 = scmp.lt.s32.totalorder %s25, 1
        %s339 = scalar_select %p338, %s25, 1
        %s340 = smul.addr %s339, 4
        %s341 = smul.addr %s340, 4
        %s342 = scalar_lea.vmem %s2, %s341
        %p343 = pneg %p105
        %p344 = pneg %p102
        %p345 = scmp.lt.s32.totalorder %s25, 1
        %s346 = scalar_select %p345, %s25, 1
        %s347 = smul.addr %s346, 4
        %s348 = smul.addr %s347, 4
        %s349 = scalar_lea.vmem %s3, %s348
        %p350 = pneg %p131
        %p351 = pneg %p128
        %p352 = scmp.lt.s32.totalorder %s25, 1
        %s353 = scalar_select %p352, %s25, 1
        %s354 = smul.addr %s353, 4
        %s355 = smul.addr %s354, 4
        %s356 = scalar_lea.vmem %s4, %s355
        %p357 = pneg %p157
        %p358 = pneg %p154
        %p359 = scmp.lt.s32.totalorder %s25, 1
        %s360 = scalar_select %p359, %s25, 1
        %s361 = smul.addr %s360, 16
        %s362 = smul.addr %s361, 4
        %s363 = scalar_lea.vmem %s5, %s362
        %p364 = pneg %p183
        %p365 = pneg %p180
        %p366 = scmp.lt.s32.totalorder %s25, 1
        %s367 = scalar_select %p366, %s25, 1
        %s368 = smul.addr %s367, 8
        %s369 = scalar_lea.vmem %s6, %s368
        %p370 = pneg %p209
        %p371 = pneg %p206
        %p372 = pneg %p235
        %p373 = pneg %p232
        %s374 = smul.u32 2, %s24
        %s375 = smul.u32 2, %s24
        %p376 = scmp.lt.s32.totalorder %s375, 1
        %s377 = scalar_select %p376, %s375, 1
        %s378 = scalar_lea.vmem %s1, %s377
        %s379 = smul.u32 2, %s24
        %p380 = scmp.lt.s32.totalorder %s25, 1
        %s381 = scalar_select %p380, %s25, 1
        %s382 = smul.addr %s381, 4
        %s383 = smul.addr %s382, 4
        %s384 = scalar_lea.vmem %s2, %s383
        %p385 = scmp.lt.s32.totalorder %s25, 1
        %s386 = scalar_select %p385, %s25, 1
        %s387 = smul.addr %s386, 4
        %s388 = smul.addr %s387, 4
        %s389 = scalar_lea.vmem %s3, %s388
        %p390 = scmp.lt.s32.totalorder %s25, 1
        %s391 = scalar_select %p390, %s25, 1
        %s392 = smul.addr %s391, 4
        %s393 = smul.addr %s392, 4
        %s394 = scalar_lea.vmem %s4, %s393
        %p395 = scmp.lt.s32.totalorder %s25, 1
        %s396 = scalar_select %p395, %s25, 1
        %s397 = smul.addr %s396, 16
        %s398 = smul.addr %s397, 4
        %s399 = scalar_lea.vmem %s5, %s398
        %p400 = scmp.lt.s32.totalorder %s25, 1
        %s401 = scalar_select %p400, %s25, 1
        %s402 = smul.addr %s401, 8
        %s403 = scalar_lea.vmem %s6, %s402
        %s404 = smul.u32 2, %s24
        %p406 = scmp.eq.s32.totalorder %s25, 0
        // Predicated region
        $region53: #{tpu_custom_call.1} parent=47 // pred_check
          %p407 = pneg %p406
        $region54: #{tpu_custom_call.1} parent=47 // pred_check_branch
          %409 = sbr.rel (%p407) target = $region56
        $region55: #{tpu_custom_call.1} parent=47 // pred_region
          %v410 = vld [vmem:[#allocation2] sm:$0xff]
          %v411 = vld [vmem:[#allocation2 + $0x8] sm:$0xff]
          %vm412 = vcmask 261120
          %413 = vst.msk [vmem:[#allocation5] sm:$0xff] %vm412, %v410
          %414 = vst.msk [vmem:[#allocation5 + $0x8] sm:$0xff] %vm412, %v411
        $region56: #{tpu_custom_call.1} parent=47 // pred_fallthru
          _
        %v415 = vld [vmem:[#allocation5] sm:$0xff]
        %v416 = vld [vmem:[#allocation5 + $0x8] sm:$0xff]
        %v417 = vpack.c.bf16 %v416, %v415
        %v418 = vld [vmem:[%s403] sm:$0xff]
        %v419 = vld [vmem:[%s384] sm:$0xf]
        %v420 = vld [vmem:[%s384 + $0x4] sm:$0xf]
        %v421 = vld [vmem:[%s384 + $0x8] sm:$0xf]
        %v422 = vld [vmem:[%s384 + $0xc] sm:$0xf]
        %v423 = vperm.slane %v418, 0
        %v428 = vunpack.c.l.b16 %v419
        %v429 = vunpack.c.l.b16 %v420
        %v430 = vunpack.c.l.b16 %v421
        %v431 = vunpack.c.l.b16 %v422
        %v432 = vpack.c.b16 %v429, %v428
        %v433 = vpack.c.b16 %v431, %v430
        %vm436 = vcmask 261120
        %v438 = vsel %vm436, %v417, 0
        %440 = vmatpush.bf16.msra.mxu0 0
        %441 = vmatpush.bf16.msra.mxu0 0
        %442 = vmatpush.bf16.msra.mxu0 0
        %443 = vmatpush.bf16.msra.mxu0 0
        %444 = vmatpush.bf16.msra.mxu0 0
        %445 = vmatpush.bf16.msra.mxu0 0
        %446 = vmatpush.bf16.msra.mxu0 %v433
        %447 = vmatpush.bf16.msra.mxu0 %v432
        %448 = vmatmul.bf16.gmra.mxu0 %v438
        %v449 = vpop.f32.mrf.mxu0
        %v450 = vadd.f32 %v423, %v449
        %v451 = vpop.f32.mrf.mxu0
        %v452 = vadd.f32 %v423, %v451
        %453 = vdwg.mxu0
        %v454 = vpack.c.bf16 %v450, %v450
        %v455 = vpack.c.bf16 %v452, %v452
        %458 = vrot.lane.b32.xlu0 %v454, 120
        %v459 = vpop.permute.xlu0 %458
        %460 = vrot.lane.b32.xlu0 %v455, 120
        %v461 = vpop.permute.xlu0 %460
        %462 = vrot.lane.b32.xlu0 %v454, 112
        %v463 = vpop.permute.xlu0 %462
        %464 = vrot.lane.b32.xlu0 %v455, 112
        %v465 = vpop.permute.xlu0 %464
        %466 = vrot.lane.b32.xlu0 %v454, 104
        %v467 = vpop.permute.xlu0 %466
        %468 = vrot.lane.b32.xlu0 %v455, 104
        %v469 = vpop.permute.xlu0 %468
        %v470 = vld [vmem:[%s378] sm:$0x1]
        %v471 = vld [vmem:[%s378 + $0x1] sm:$0x1]
        %v474 = vperm.slane %v470, 0
        %v475 = vperm.slane %v471, 0
        %v478 = vunpack.c.l.b16 %v454
        %v479 = vpack.c.b16 %v478, %v478
        %480 = vrot.lane.b32.xlu0 %v479, 96
        %v481 = vpop.permute.xlu0 %480
        %vm482 = vcmask 64512
        %v484 = vsel %vm482, %v454, 0
        %v487 = vsel %vm482, %v481, 0
        %489 = vmatpush.bf16.xpose.msra.mxu0 0
        %490 = vmatpush.bf16.xpose.msra.mxu0 0
        %491 = vmatpush.bf16.xpose.msra.mxu0 0
        %492 = vmatpush.bf16.xpose.msra.mxu0 0
        %493 = vmatpush.bf16.xpose.msra.mxu0 0
        %494 = vmatpush.bf16.xpose.msra.mxu0 0
        %495 = vmatpush.bf16.xpose.msra.mxu0 0
        %496 = vmatpush.bf16.xpose.msra.mxu0 %v487
        %497 = vmatmul.bf16.gmra.mxu0 %v484
        %v498 = vpop.f32.mrf.mxu0
        %v499 = vadd.f32 %v474, %v498
        %v500 = vpop.f32.mrf.mxu0
        %501 = vdwg.mxu0
        %v502 = vunpack.c.l.b16 %v455
        %v503 = vpack.c.b16 %v502, %v502
        %504 = vrot.lane.b32.xlu0 %v503, 96
        %v505 = vpop.permute.xlu0 %504
        %v507 = vsel %vm482, %v455, 0
        %v510 = vsel %vm482, %v505, 0
        %512 = vmatpush.bf16.xpose.msra.mxu0 0
        %513 = vmatpush.bf16.xpose.msra.mxu0 0
        %514 = vmatpush.bf16.xpose.msra.mxu0 0
        %515 = vmatpush.bf16.xpose.msra.mxu0 0
        %516 = vmatpush.bf16.xpose.msra.mxu0 0
        %517 = vmatpush.bf16.xpose.msra.mxu0 0
        %518 = vmatpush.bf16.xpose.msra.mxu0 0
        %519 = vmatpush.bf16.xpose.msra.mxu0 %v510
        %520 = vmatmul.bf16.gmra.mxu0 %v507
        %v521 = vpop.f32.mrf.mxu0
        %v522 = vadd.f32 %v475, %v521
        %v523 = vpop.f32.mrf.mxu0
        %524 = vdwg.mxu0
        %v525 = vunpack.c.l.b16 %v459
        %v526 = vpack.c.b16 %v525, %v525
        %527 = vrot.lane.b32.xlu0 %v526, 96
        %v528 = vpop.permute.xlu0 %527
        %v530 = vsel %vm482, %v459, 0
        %v533 = vsel %vm482, %v528, 0
        %535 = vmatpush.bf16.xpose.msra.mxu0 0
        %536 = vmatpush.bf16.xpose.msra.mxu0 0
        %537 = vmatpush.bf16.xpose.msra.mxu0 0
        %538 = vmatpush.bf16.xpose.msra.mxu0 0
        %539 = vmatpush.bf16.xpose.msra.mxu0 0
        %540 = vmatpush.bf16.xpose.msra.mxu0 0
        %541 = vmatpush.bf16.xpose.msra.mxu0 0
        %542 = vmatpush.bf16.xpose.msra.mxu0 %v533
        %543 = vmatmul.bf16.gmra.mxu0 %v530
        %v544 = vpop.f32.mrf.mxu0
        %v545 = vadd.f32 %v474, %v544
        %v546 = vpop.f32.mrf.mxu0
        %547 = vdwg.mxu0
        %v548 = vunpack.c.l.b16 %v461
        %v549 = vpack.c.b16 %v548, %v548
        %550 = vrot.lane.b32.xlu0 %v549, 96
        %v551 = vpop.permute.xlu0 %550
        %v553 = vsel %vm482, %v461, 0
        %v556 = vsel %vm482, %v551, 0
        %558 = vmatpush.bf16.xpose.msra.mxu0 0
        %559 = vmatpush.bf16.xpose.msra.mxu0 0
        %560 = vmatpush.bf16.xpose.msra.mxu0 0
        %561 = vmatpush.bf16.xpose.msra.mxu0 0
        %562 = vmatpush.bf16.xpose.msra.mxu0 0
        %563 = vmatpush.bf16.xpose.msra.mxu0 0
        %564 = vmatpush.bf16.xpose.msra.mxu0 0
        %565 = vmatpush.bf16.xpose.msra.mxu0 %v556
        %566 = vmatmul.bf16.gmra.mxu0 %v553
        %v567 = vpop.f32.mrf.mxu0
        %v568 = vadd.f32 %v475, %v567
        %v569 = vpop.f32.mrf.mxu0
        %570 = vdwg.mxu0
        %v571 = vunpack.c.l.b16 %v463
        %v572 = vpack.c.b16 %v571, %v571
        %573 = vrot.lane.b32.xlu0 %v572, 96
        %v574 = vpop.permute.xlu0 %573
        %v576 = vsel %vm482, %v463, 0
        %v579 = vsel %vm482, %v574, 0
        %581 = vmatpush.bf16.xpose.msra.mxu0 0
        %582 = vmatpush.bf16.xpose.msra.mxu0 0
        %583 = vmatpush.bf16.xpose.msra.mxu0 0
        %584 = vmatpush.bf16.xpose.msra.mxu0 0
        %585 = vmatpush.bf16.xpose.msra.mxu0 0
        %586 = vmatpush.bf16.xpose.msra.mxu0 0
        %587 = vmatpush.bf16.xpose.msra.mxu0 0
        %588 = vmatpush.bf16.xpose.msra.mxu0 %v579
        %589 = vmatmul.bf16.gmra.mxu0 %v576
        %v590 = vpop.f32.mrf.mxu0
        %v591 = vadd.f32 %v474, %v590
        %v592 = vpop.f32.mrf.mxu0
        %593 = vdwg.mxu0
        %v594 = vunpack.c.l.b16 %v465
        %v595 = vpack.c.b16 %v594, %v594
        %596 = vrot.lane.b32.xlu0 %v595, 96
        %v597 = vpop.permute.xlu0 %596
        %v599 = vsel %vm482, %v465, 0
        %v602 = vsel %vm482, %v597, 0
        %604 = vmatpush.bf16.xpose.msra.mxu0 0
        %605 = vmatpush.bf16.xpose.msra.mxu0 0
        %606 = vmatpush.bf16.xpose.msra.mxu0 0
        %607 = vmatpush.bf16.xpose.msra.mxu0 0
        %608 = vmatpush.bf16.xpose.msra.mxu0 0
        %609 = vmatpush.bf16.xpose.msra.mxu0 0
        %610 = vmatpush.bf16.xpose.msra.mxu0 0
        %611 = vmatpush.bf16.xpose.msra.mxu0 %v602
        %612 = vmatmul.bf16.gmra.mxu0 %v599
        %v613 = vpop.f32.mrf.mxu0
        %v614 = vadd.f32 %v475, %v613
        %v615 = vpop.f32.mrf.mxu0
        %616 = vdwg.mxu0
        %v617 = vunpack.c.l.b16 %v467
        %v618 = vpack.c.b16 %v617, %v617
        %619 = vrot.lane.b32.xlu0 %v618, 96
        %v620 = vpop.permute.xlu0 %619
        %v622 = vsel %vm482, %v467, 0
        %v625 = vsel %vm482, %v620, 0
        %627 = vmatpush.bf16.xpose.msra.mxu0 0
        %628 = vmatpush.bf16.xpose.msra.mxu0 0
        %629 = vmatpush.bf16.xpose.msra.mxu0 0
        %630 = vmatpush.bf16.xpose.msra.mxu0 0
        %631 = vmatpush.bf16.xpose.msra.mxu0 0
        %632 = vmatpush.bf16.xpose.msra.mxu0 0
        %633 = vmatpush.bf16.xpose.msra.mxu0 0
        %634 = vmatpush.bf16.xpose.msra.mxu0 %v625
        %635 = vmatmul.bf16.gmra.mxu0 %v622
        %v636 = vpop.f32.mrf.mxu0
        %v637 = vadd.f32 %v474, %v636
        %v638 = vpop.f32.mrf.mxu0
        %639 = vdwg.mxu0
        %v640 = vunpack.c.l.b16 %v469
        %v641 = vpack.c.b16 %v640, %v640
        %642 = vrot.lane.b32.xlu0 %v641, 96
        %v643 = vpop.permute.xlu0 %642
        %v645 = vsel %vm482, %v469, 0
        %v648 = vsel %vm482, %v643, 0
        %650 = vmatpush.bf16.xpose.msra.mxu0 0
        %651 = vmatpush.bf16.xpose.msra.mxu0 0
        %652 = vmatpush.bf16.xpose.msra.mxu0 0
        %653 = vmatpush.bf16.xpose.msra.mxu0 0
        %654 = vmatpush.bf16.xpose.msra.mxu0 0
        %655 = vmatpush.bf16.xpose.msra.mxu0 0
        %656 = vmatpush.bf16.xpose.msra.mxu0 0
        %657 = vmatpush.bf16.xpose.msra.mxu0 %v648
        %658 = vmatmul.bf16.gmra.mxu0 %v645
        %v659 = vpop.f32.mrf.mxu0
        %v660 = vadd.f32 %v475, %v659
        %v661 = vpop.f32.mrf.mxu0
        %662 = vdwg.mxu0
        %v663 = vsel %vm482, %v499, -inf
        %664 = vmax.xlane.f32.xlu0 %v663
        %v665 = vpop.xlane.xlu0 %664
        %v666 = vsel %vm482, %v522, -inf
        %667 = vmax.xlane.f32.xlu0 %v666
        %v668 = vpop.xlane.xlu0 %667
        %v669 = vsel %vm482, %v545, -inf
        %670 = vmax.xlane.f32.xlu0 %v669
        %v671 = vpop.xlane.xlu0 %670
        %v672 = vsel %vm482, %v568, -inf
        %673 = vmax.xlane.f32.xlu0 %v672
        %v674 = vpop.xlane.xlu0 %673
        %v675 = vsel %vm482, %v591, -inf
        %676 = vmax.xlane.f32.xlu0 %v675
        %v677 = vpop.xlane.xlu0 %676
        %v678 = vsel %vm482, %v614, -inf
        %679 = vmax.xlane.f32.xlu0 %v678
        %v680 = vpop.xlane.xlu0 %679
        %v681 = vsel %vm482, %v637, -inf
        %682 = vmax.xlane.f32.xlu0 %v681
        %v683 = vpop.xlane.xlu0 %682
        %v684 = vsel %vm482, %v660, -inf
        %685 = vmax.xlane.f32.xlu0 %v684
        %v686 = vpop.xlane.xlu0 %685
        %v687 = vsub.f32 %v499, %v665
        %v688 = vsub.f32 %v522, %v668
        %v689 = vsub.f32 %v545, %v671
        %v690 = vsub.f32 %v568, %v674
        %v691 = vsub.f32 %v591, %v677
        %v692 = vsub.f32 %v614, %v680
        %v693 = vsub.f32 %v637, %v683
        %v694 = vsub.f32 %v660, %v686
        %v695 = vmul.f32 %v687, 1.442695
        %v696 = vpow.pop %v695
        %v697 = vmul.f32 %v688, 1.442695
        %v698 = vpow.pop %v697
        %v699 = vmul.f32 %v689, 1.442695
        %v700 = vpow.pop %v699
        %v701 = vmul.f32 %v690, 1.442695
        %v702 = vpow.pop %v701
        %v703 = vmul.f32 %v691, 1.442695
        %v704 = vpow.pop %v703
        %v705 = vmul.f32 %v692, 1.442695
        %v706 = vpow.pop %v705
        %v707 = vmul.f32 %v693, 1.442695
        %v708 = vpow.pop %v707
        %v709 = vmul.f32 %v694, 1.442695
        %v710 = vpow.pop %v709
        %v711 = vsel %vm482, %v696, 0.0
        %712 = vadd.xlane.f32.xlu0 %v711
        %v713 = vpop.xlane.xlu0 %712
        %v714 = vsel %vm482, %v698, 0.0
        %715 = vadd.xlane.f32.xlu0 %v714
        %v716 = vpop.xlane.xlu0 %715
        %v717 = vsel %vm482, %v700, 0.0
        %718 = vadd.xlane.f32.xlu0 %v717
        %v719 = vpop.xlane.xlu0 %718
        %v720 = vsel %vm482, %v702, 0.0
        %721 = vadd.xlane.f32.xlu0 %v720
        %v722 = vpop.xlane.xlu0 %721
        %v723 = vsel %vm482, %v704, 0.0
        %724 = vadd.xlane.f32.xlu0 %v723
        %v725 = vpop.xlane.xlu0 %724
        %v726 = vsel %vm482, %v706, 0.0
        %727 = vadd.xlane.f32.xlu0 %v726
        %v728 = vpop.xlane.xlu0 %727
        %v729 = vsel %vm482, %v708, 0.0
        %730 = vadd.xlane.f32.xlu0 %v729
        %v731 = vpop.xlane.xlu0 %730
        %v732 = vsel %vm482, %v710, 0.0
        %733 = vadd.xlane.f32.xlu0 %v732
        %v734 = vpop.xlane.xlu0 %733
        %v735 = vrcp.pop %v713
        %v736 = vrcp.pop %v716
        %v737 = vrcp.pop %v719
        %v738 = vrcp.pop %v722
        %v739 = vrcp.pop %v725
        %v740 = vrcp.pop %v728
        %v741 = vrcp.pop %v731
        %v742 = vrcp.pop %v734
        %v743 = vmul.f32 %v696, %v735
        %v744 = vmul.f32 %v698, %v736
        %v745 = vmul.f32 %v700, %v737
        %v746 = vmul.f32 %v702, %v738
        %v747 = vmul.f32 %v704, %v739
        %v748 = vmul.f32 %v706, %v740
        %v749 = vmul.f32 %v708, %v741
        %v750 = vmul.f32 %v710, %v742
        %v751 = vpack.c.bf16 %v743, %v743
        %v752 = vpack.c.bf16 %v744, %v744
        %v753 = vpack.c.bf16 %v745, %v745
        %v754 = vpack.c.bf16 %v746, %v746
        %v755 = vpack.c.bf16 %v747, %v747
        %v756 = vpack.c.bf16 %v748, %v748
        %v757 = vpack.c.bf16 %v749, %v749
        %v758 = vpack.c.bf16 %v750, %v750
        %759 = vrot.lane.b32.xlu0 %v479, 64
        %v760 = vpop.permute.xlu0 %759
        %v762 = vsel %vm482, %v751, 0
        %vm764 = vcmask 1043456
        %v766 = vsel %vm764, %v760, 0
        %768 = vmatpush.bf16.msra.mxu0 0
        %769 = vmatpush.bf16.msra.mxu0 0
        %770 = vmatpush.bf16.msra.mxu0 0
        %771 = vmatpush.bf16.msra.mxu0 0
        %772 = vmatpush.bf16.msra.mxu0 0
        %773 = vmatpush.bf16.msra.mxu0 0
        %774 = vmatpush.bf16.msra.mxu0 0
        %775 = vmatpush.bf16.msra.mxu0 %v766
        %776 = vmatmul.bf16.gmra.mxu0 %v762
        %v777 = vpop.f32.mrf.mxu0
        %v778 = vadd.f32 0.0, %v777
        %v779 = vpop.f32.mrf.mxu0
        %780 = vdwg.mxu0
        %781 = vrot.lane.b32.xlu0 %v503, 64
        %v782 = vpop.permute.xlu0 %781
        %v784 = vsel %vm482, %v752, 0
        %v787 = vsel %vm764, %v782, 0
        %789 = vmatpush.bf16.msra.mxu0 0
        %790 = vmatpush.bf16.msra.mxu0 0
        %791 = vmatpush.bf16.msra.mxu0 0
        %792 = vmatpush.bf16.msra.mxu0 0
        %793 = vmatpush.bf16.msra.mxu0 0
        %794 = vmatpush.bf16.msra.mxu0 0
        %795 = vmatpush.bf16.msra.mxu0 0
        %796 = vmatpush.bf16.msra.mxu0 %v787
        %797 = vmatmul.bf16.gmra.mxu0 %v784
        %v798 = vpop.f32.mrf.mxu0
        %v799 = vadd.f32 0.0, %v798
        %v800 = vpop.f32.mrf.mxu0
        %801 = vdwg.mxu0
        %802 = vrot.lane.b32.xlu0 %v526, 64
        %v803 = vpop.permute.xlu0 %802
        %v805 = vsel %vm482, %v753, 0
        %v808 = vsel %vm764, %v803, 0
        %810 = vmatpush.bf16.msra.mxu0 0
        %811 = vmatpush.bf16.msra.mxu0 0
        %812 = vmatpush.bf16.msra.mxu0 0
        %813 = vmatpush.bf16.msra.mxu0 0
        %814 = vmatpush.bf16.msra.mxu0 0
        %815 = vmatpush.bf16.msra.mxu0 0
        %816 = vmatpush.bf16.msra.mxu0 0
        %817 = vmatpush.bf16.msra.mxu0 %v808
        %818 = vmatmul.bf16.gmra.mxu0 %v805
        %v819 = vpop.f32.mrf.mxu0
        %v820 = vadd.f32 0.0, %v819
        %v821 = vpop.f32.mrf.mxu0
        %822 = vdwg.mxu0
        %823 = vrot.lane.b32.xlu0 %v549, 64
        %v824 = vpop.permute.xlu0 %823
        %v826 = vsel %vm482, %v754, 0
        %v829 = vsel %vm764, %v824, 0
        %831 = vmatpush.bf16.msra.mxu0 0
        %832 = vmatpush.bf16.msra.mxu0 0
        %833 = vmatpush.bf16.msra.mxu0 0
        %834 = vmatpush.bf16.msra.mxu0 0
        %835 = vmatpush.bf16.msra.mxu0 0
        %836 = vmatpush.bf16.msra.mxu0 0
        %837 = vmatpush.bf16.msra.mxu0 0
        %838 = vmatpush.bf16.msra.mxu0 %v829
        %839 = vmatmul.bf16.gmra.mxu0 %v826
        %v840 = vpop.f32.mrf.mxu0
        %v841 = vadd.f32 0.0, %v840
        %v842 = vpop.f32.mrf.mxu0
        %843 = vdwg.mxu0
        %844 = vrot.lane.b32.xlu0 %v572, 64
        %v845 = vpop.permute.xlu0 %844
        %v847 = vsel %vm482, %v755, 0
        %v850 = vsel %vm764, %v845, 0
        %852 = vmatpush.bf16.msra.mxu0 0
        %853 = vmatpush.bf16.msra.mxu0 0
        %854 = vmatpush.bf16.msra.mxu0 0
        %855 = vmatpush.bf16.msra.mxu0 0
        %856 = vmatpush.bf16.msra.mxu0 0
        %857 = vmatpush.bf16.msra.mxu0 0
        %858 = vmatpush.bf16.msra.mxu0 0
        %859 = vmatpush.bf16.msra.mxu0 %v850
        %860 = vmatmul.bf16.gmra.mxu0 %v847
        %v861 = vpop.f32.mrf.mxu0
        %v862 = vadd.f32 0.0, %v861
        %v863 = vpop.f32.mrf.mxu0
        %864 = vdwg.mxu0
        %865 = vrot.lane.b32.xlu0 %v595, 64
        %v866 = vpop.permute.xlu0 %865
        %v868 = vsel %vm482, %v756, 0
        %v871 = vsel %vm764, %v866, 0
        %873 = vmatpush.bf16.msra.mxu0 0
        %874 = vmatpush.bf16.msra.mxu0 0
        %875 = vmatpush.bf16.msra.mxu0 0
        %876 = vmatpush.bf16.msra.mxu0 0
        %877 = vmatpush.bf16.msra.mxu0 0
        %878 = vmatpush.bf16.msra.mxu0 0
        %879 = vmatpush.bf16.msra.mxu0 0
        %880 = vmatpush.bf16.msra.mxu0 %v871
        %881 = vmatmul.bf16.gmra.mxu0 %v868
        %v882 = vpop.f32.mrf.mxu0
        %v883 = vadd.f32 0.0, %v882
        %v884 = vpop.f32.mrf.mxu0
        %885 = vdwg.mxu0
        %886 = vrot.lane.b32.xlu0 %v618, 64
        %v887 = vpop.permute.xlu0 %886
        %v889 = vsel %vm482, %v757, 0
        %v892 = vsel %vm764, %v887, 0
        %894 = vmatpush.bf16.msra.mxu0 0
        %895 = vmatpush.bf16.msra.mxu0 0
        %896 = vmatpush.bf16.msra.mxu0 0
        %897 = vmatpush.bf16.msra.mxu0 0
        %898 = vmatpush.bf16.msra.mxu0 0
        %899 = vmatpush.bf16.msra.mxu0 0
        %900 = vmatpush.bf16.msra.mxu0 0
        %901 = vmatpush.bf16.msra.mxu0 %v892
        %902 = vmatmul.bf16.gmra.mxu0 %v889
        %v903 = vpop.f32.mrf.mxu0
        %v904 = vadd.f32 0.0, %v903
        %v905 = vpop.f32.mrf.mxu0
        %906 = vdwg.mxu0
        %907 = vrot.lane.b32.xlu0 %v641, 64
        %v908 = vpop.permute.xlu0 %907
        %v910 = vsel %vm482, %v758, 0
        %v913 = vsel %vm764, %v908, 0
        %915 = vmatpush.bf16.msra.mxu0 0
        %916 = vmatpush.bf16.msra.mxu0 0
        %917 = vmatpush.bf16.msra.mxu0 0
        %918 = vmatpush.bf16.msra.mxu0 0
        %919 = vmatpush.bf16.msra.mxu0 0
        %920 = vmatpush.bf16.msra.mxu0 0
        %921 = vmatpush.bf16.msra.mxu0 0
        %922 = vmatpush.bf16.msra.mxu0 %v913
        %923 = vmatmul.bf16.gmra.mxu0 %v910
        %v924 = vpop.f32.mrf.mxu0
        %v925 = vadd.f32 0.0, %v924
        %v926 = vpop.f32.mrf.mxu0
        %927 = vdwg.mxu0
        %v928 = vpack.c.bf16 %v778, %v778
        %v929 = vpack.c.bf16 %v799, %v799
        %v930 = vpack.c.bf16 %v820, %v820
        %v931 = vpack.c.bf16 %v841, %v841
        %v932 = vpack.c.bf16 %v862, %v862
        %v933 = vpack.c.bf16 %v883, %v883
        %v934 = vpack.c.bf16 %v904, %v904
        %v935 = vpack.c.bf16 %v925, %v925
        %v938 = vunpack.c.l.b16 %v928
        %v939 = vunpack.c.l.b16 %v929
        %v940 = vpack.c.b16 %v939, %v938
        %v943 = vunpack.c.l.b16 %v930
        %v944 = vunpack.c.l.b16 %v931
        %v945 = vpack.c.b16 %v944, %v943
        %946 = vrot.lane.b32.xlu0 %v945, 8
        %v947 = vpop.permute.xlu0 %946
        %v950 = vunpack.c.l.b16 %v932
        %v951 = vunpack.c.l.b16 %v933
        %v952 = vpack.c.b16 %v951, %v950
        %953 = vrot.lane.b32.xlu0 %v952, 16
        %v954 = vpop.permute.xlu0 %953
        %v957 = vunpack.c.l.b16 %v934
        %v958 = vunpack.c.l.b16 %v935
        %v959 = vpack.c.b16 %v958, %v957
        %960 = vrot.lane.b32.xlu0 %v959, 24
        %v961 = vpop.permute.xlu0 %960
        %v964 = vsel %vm482, %v940, %v947
        %vm965 = vcmask 130048
        %v967 = vsel %vm965, %v964, %v954
        %vm968 = vcmask 195584
        %v970 = vsel %vm968, %v967, %v961
        %v971 = vld [vmem:[%s389] sm:$0xf]
        %v972 = vld [vmem:[%s389 + $0x4] sm:$0xf]
        %v973 = vld [vmem:[%s389 + $0x8] sm:$0xf]
        %v974 = vld [vmem:[%s389 + $0xc] sm:$0xf]
        %v975 = vperm.slane %v418, 1
        %v980 = vunpack.c.l.b16 %v971
        %v981 = vunpack.c.l.b16 %v972
        %v982 = vunpack.c.l.b16 %v973
        %v983 = vunpack.c.l.b16 %v974
        %v984 = vpack.c.b16 %v981, %v980
        %v985 = vpack.c.b16 %v983, %v982
        %v988 = vsel %vm436, %v970, 0
        %990 = vmatpush.bf16.msra.mxu0 0
        %991 = vmatpush.bf16.msra.mxu0 0
        %992 = vmatpush.bf16.msra.mxu0 0
        %993 = vmatpush.bf16.msra.mxu0 0
        %994 = vmatpush.bf16.msra.mxu0 0
        %995 = vmatpush.bf16.msra.mxu0 0
        %996 = vmatpush.bf16.msra.mxu0 %v985
        %997 = vmatpush.bf16.msra.mxu0 %v984
        %998 = vmatmul.bf16.gmra.mxu0 %v988
        %v999 = vpop.f32.mrf.mxu0
        %v1000 = vadd.f32 %v975, %v999
        %v1001 = vpop.f32.mrf.mxu0
        %v1002 = vadd.f32 %v975, %v1001
        %1003 = vdwg.mxu0
        %v1004 = vadd.f32 %v1000, %v415
        %v1005 = vadd.f32 %v1002, %v416
        %v1006 = vsel %vm436, %v1004, 0.0
        %1007 = vadd.xlane.f32.xlu0 %v1006
        %v1008 = vpop.xlane.xlu0 %1007
        %v1009 = vsel %vm436, %v1005, 0.0
        %1010 = vadd.xlane.f32.xlu0 %v1009
        %v1011 = vpop.xlane.xlu0 %1010
        %v1012 = vrcp.pop 32.0
        %v1013 = vmul.f32 32.0, %v1012
        %v1014 = vsub.f32 1.0, %v1013
        %v1015 = vmul.f32 %v1012, %v1014
        %v1016 = vadd.f32 %v1012, %v1015
        %vm1017 = vweird.f32 %v1012
        %v1018 = vsel %vm1017, %v1012, %v1016
        %v1019 = vmul.f32 %v1008, %v1018
        %v1020 = vmul.f32 %v1011, %v1018
        %v1021 = vsub.f32 %v1004, %v1019
        %v1022 = vsub.f32 %v1005, %v1020
        %v1023 = vmul.f32 %v1021, %v1021
        %v1024 = vmul.f32 %v1022, %v1022
        %v1025 = vsel %vm436, %v1023, 0.0
        %1026 = vadd.xlane.f32.xlu0 %v1025
        %v1027 = vpop.xlane.xlu0 %1026
        %v1028 = vsel %vm436, %v1024, 0.0
        %1029 = vadd.xlane.f32.xlu0 %v1028
        %v1030 = vpop.xlane.xlu0 %1029
        %v1031 = vmul.f32 %v1027, %v1018
        %v1032 = vmul.f32 %v1030, %v1018
        %v1033 = vadd.f32 %v1031, 1e-12
        %v1034 = vadd.f32 %v1032, 1e-12
        %v1035 = vrsqrt.pop %v1033
        %v1036 = vmul.f32 %v1035, %v1033
        %v1037 = vmul.f32 %v1036, %v1035
        %v1038 = vmul.f32 0.5, %v1037
        %v1039 = vsub.f32 1.5, %v1038
        %v1040 = vmul.f32 %v1035, %v1039
        %vm1041 = vweird.f32 %v1033
        %vm1042 = vweird.f32 %v1035
        %vm1043 = vmor %vm1041, %vm1042
        %v1044 = vsel %vm1043, %v1035, %v1040
        %v1045 = vrsqrt.pop %v1034
        %v1046 = vmul.f32 %v1045, %v1034
        %v1047 = vmul.f32 %v1046, %v1045
        %v1048 = vmul.f32 0.5, %v1047
        %v1049 = vsub.f32 1.5, %v1048
        %v1050 = vmul.f32 %v1045, %v1049
        %vm1051 = vweird.f32 %v1034
        %vm1052 = vweird.f32 %v1045
        %vm1053 = vmor %vm1051, %vm1052
        %v1054 = vsel %vm1053, %v1045, %v1050
        %v1055 = vmul.f32 %v1021, %v1044
        %v1056 = vmul.f32 %v1022, %v1054
        %v1057 = vperm.slane %v418, 2
        %v1058 = vmul.f32 %v1055, %v1057
        %v1059 = vmul.f32 %v1056, %v1057
        %v1060 = vperm.slane %v418, 3
        %v1061 = vadd.f32 %v1058, %v1060
        %v1062 = vadd.f32 %v1059, %v1060
        %v1063 = vpack.c.bf16 %v1062, %v1061
        %v1064 = vld [vmem:[%s394] sm:$0xf]
        %v1065 = vld [vmem:[%s394 + $0x4] sm:$0xf]
        %v1066 = vld [vmem:[%s394 + $0x8] sm:$0xf]
        %v1067 = vld [vmem:[%s394 + $0xc] sm:$0xf]
        %v1068 = vperm.slane %v418, 4
        %v1073 = vunpack.c.l.b16 %v1064
        %v1074 = vunpack.c.l.b16 %v1065
        %v1075 = vunpack.c.l.b16 %v1066
        %v1076 = vunpack.c.l.b16 %v1067
        %v1077 = vpack.c.b16 %v1074, %v1073
        %v1078 = vpack.c.b16 %v1076, %v1075
        %v1082 = vsel %vm436, %v1063, 0
        %1084 = vmatpush.bf16.msra.mxu0 0
        %1085 = vmatpush.bf16.msra.mxu0 0
        %1086 = vmatpush.bf16.msra.mxu0 0
        %1087 = vmatpush.bf16.msra.mxu0 0
        %1088 = vmatpush.bf16.msra.mxu0 0
        %1089 = vmatpush.bf16.msra.mxu0 0
        %1090 = vmatpush.bf16.msra.mxu0 %v1078
        %1091 = vmatpush.bf16.msra.mxu0 %v1077
        %1092 = vmatmul.bf16.gmra.mxu0 %v1082
        %v1093 = vpop.f32.mrf.mxu0
        %v1094 = vadd.f32 %v1068, %v1093
        %v1095 = vpop.f32.mrf.mxu0
        %v1096 = vadd.f32 %v1068, %v1095
        %1097 = vdwg.mxu0
        %v1098 = vmul.f32 %v1094, 0.5
        %v1099 = vmul.f32 %v1096, 0.5
        %v1100 = vmul.f32 %v1094, 0.70710677
        %v1101 = vmul.f32 %v1096, 0.70710677
        %v1102 = vmul.f32 %v1100, %v1100
        %v1103 = vmin.f32 16.0, %v1102
        %v1104 = vmul.f32 %v1103, 2.1237322e-06
        %v1105 = vadd.f32 %v1104, 0.00028619796
        %v1106 = vmul.f32 %v1103, %v1105
        %v1107 = vadd.f32 %v1106, 0.0036580483
        %v1108 = vmul.f32 %v1103, %v1107
        %v1109 = vadd.f32 %v1108, 0.05243302
        %v1110 = vmul.f32 %v1103, %v1109
        %v1111 = vadd.f32 %v1110, 0.18741608
        %v1112 = vmul.f32 %v1103, %v1111
        %v1113 = vadd.f32 %v1112, 1.1283791
        %v1114 = vmul.f32 %v1100, %v1113
        %v1115 = vmul.f32 %v1103, 3.8918573e-05
        %v1116 = vadd.f32 %v1115, 0.001143296
        %v1117 = vmul.f32 %v1103, %v1116
        %v1118 = vadd.f32 %v1117, 0.014752088
        %v1119 = vmul.f32 %v1103, %v1118
        %v1120 = vadd.f32 %v1119, 0.112945676
        %v1121 = vmul.f32 %v1103, %v1120
        %v1122 = vadd.f32 %v1121, 0.4994258
        %v1123 = vmul.f32 %v1103, %v1122
        %v1124 = vadd.f32 %v1123, 1.0
        %v1125 = vrcp.pop %v1124
        %v1126 = vmul.f32 %v1124, %v1125
        %v1127 = vsub.f32 1.0, %v1126
        %v1128 = vmul.f32 %v1125, %v1127
        %v1129 = vadd.f32 %v1125, %v1128
        %vm1130 = vweird.f32 %v1124
        %vm1131 = vweird.f32 %v1125
        %vm1132 = vmor %vm1130, %vm1131
        %v1133 = vsel %vm1132, %v1125, %v1129
        %v1134 = vand.u32 2147483647, %v1124
        %vm1135 = vcmp.eq.f32.partialorder %v1134, 8.507059e+37
        %v1136 = vand.u32 %v1124, 2147483648
        %v1137 = vor.u32 1.1754944e-38, %v1136
        %v1138 = vsel %vm1135, %v1137, %v1133
        %v1139 = vmul.f32 %v1114, %v1138
        %v1140 = vmin.f32 %v1139, 1.0
        %v1141 = vmax.f32 %v1140, -1.0
        %v1142 = vmul.f32 %v1101, %v1101
        %v1143 = vmin.f32 16.0, %v1142
        %v1144 = vmul.f32 %v1143, 2.1237322e-06
        %v1145 = vadd.f32 %v1144, 0.00028619796
        %v1146 = vmul.f32 %v1143, %v1145
        %v1147 = vadd.f32 %v1146, 0.0036580483
        %v1148 = vmul.f32 %v1143, %v1147
        %v1149 = vadd.f32 %v1148, 0.05243302
        %v1150 = vmul.f32 %v1143, %v1149
        %v1151 = vadd.f32 %v1150, 0.18741608
        %v1152 = vmul.f32 %v1143, %v1151
        %v1153 = vadd.f32 %v1152, 1.1283791
        %v1154 = vmul.f32 %v1101, %v1153
        %v1155 = vmul.f32 %v1143, 3.8918573e-05
        %v1156 = vadd.f32 %v1155, 0.001143296
        %v1157 = vmul.f32 %v1143, %v1156
        %v1158 = vadd.f32 %v1157, 0.014752088
        %v1159 = vmul.f32 %v1143, %v1158
        %v1160 = vadd.f32 %v1159, 0.112945676
        %v1161 = vmul.f32 %v1143, %v1160
        %v1162 = vadd.f32 %v1161, 0.4994258
        %v1163 = vmul.f32 %v1143, %v1162
        %v1164 = vadd.f32 %v1163, 1.0
        %v1165 = vrcp.pop %v1164
        %v1166 = vmul.f32 %v1164, %v1165
        %v1167 = vsub.f32 1.0, %v1166
        %v1168 = vmul.f32 %v1165, %v1167
        %v1169 = vadd.f32 %v1165, %v1168
        %vm1170 = vweird.f32 %v1164
        %vm1171 = vweird.f32 %v1165
        %vm1172 = vmor %vm1170, %vm1171
        %v1173 = vsel %vm1172, %v1165, %v1169
        %v1174 = vand.u32 2147483647, %v1164
        %vm1175 = vcmp.eq.f32.partialorder %v1174, 8.507059e+37
        %v1176 = vand.u32 %v1164, 2147483648
        %v1177 = vor.u32 1.1754944e-38, %v1176
        %v1178 = vsel %vm1175, %v1177, %v1173
        %v1179 = vmul.f32 %v1154, %v1178
        %v1180 = vmin.f32 %v1179, 1.0
        %v1181 = vmax.f32 %v1180, -1.0
        %v1182 = vadd.f32 %v1141, 1.0
        %v1183 = vadd.f32 %v1181, 1.0
        %v1184 = vmul.f32 %v1098, %v1182
        %v1185 = vmul.f32 %v1099, %v1183
        %v1186 = vpack.c.bf16 %v1185, %v1184
        %v1187 = vld [vmem:[%s399] sm:$0xf]
        %v1188 = vld [vmem:[%s399 + $0x4] sm:$0xf]
        %v1189 = vld [vmem:[%s399 + $0x8] sm:$0xf]
        %v1190 = vld [vmem:[%s399 + $0xc] sm:$0xf]
        %v1191 = vld [vmem:[%s399 + $0x10] sm:$0xf]
        %v1192 = vld [vmem:[%s399 + $0x14] sm:$0xf]
        %v1193 = vld [vmem:[%s399 + $0x18] sm:$0xf]
        %v1194 = vld [vmem:[%s399 + $0x1c] sm:$0xf]
        %v1195 = vld [vmem:[%s399 + $0x20] sm:$0xf]
        %v1196 = vld [vmem:[%s399 + $0x24] sm:$0xf]
        %v1197 = vld [vmem:[%s399 + $0x28] sm:$0xf]
        %v1198 = vld [vmem:[%s399 + $0x2c] sm:$0xf]
        %v1199 = vld [vmem:[%s399 + $0x30] sm:$0xf]
        %v1200 = vld [vmem:[%s399 + $0x34] sm:$0xf]
        %v1201 = vld [vmem:[%s399 + $0x38] sm:$0xf]
        %v1202 = vld [vmem:[%s399 + $0x3c] sm:$0xf]
        %v1203 = vperm.slane %v418, 5
        %v1220 = vunpack.c.l.b16 %v1187
        %v1221 = vunpack.c.l.b16 %v1188
        %v1222 = vunpack.c.l.b16 %v1189
        %v1223 = vunpack.c.l.b16 %v1190
        %v1224 = vunpack.c.l.b16 %v1191
        %v1225 = vunpack.c.l.b16 %v1192
        %v1226 = vunpack.c.l.b16 %v1193
        %v1227 = vunpack.c.l.b16 %v1194
        %v1228 = vunpack.c.l.b16 %v1195
        %v1229 = vunpack.c.l.b16 %v1196
        %v1230 = vunpack.c.l.b16 %v1197
        %v1231 = vunpack.c.l.b16 %v1198
        %v1232 = vunpack.c.l.b16 %v1199
        %v1233 = vunpack.c.l.b16 %v1200
        %v1234 = vunpack.c.l.b16 %v1201
        %v1235 = vunpack.c.l.b16 %v1202
        %v1236 = vpack.c.b16 %v1221, %v1220
        %v1237 = vpack.c.b16 %v1223, %v1222
        %v1238 = vpack.c.b16 %v1225, %v1224
        %v1239 = vpack.c.b16 %v1227, %v1226
        %v1240 = vpack.c.b16 %v1229, %v1228
        %v1241 = vpack.c.b16 %v1231, %v1230
        %v1242 = vpack.c.b16 %v1233, %v1232
        %v1243 = vpack.c.b16 %v1235, %v1234
        %1252 = vmatpush.bf16.msra.mxu0 %v1243
        %1253 = vmatpush.bf16.msra.mxu0 %v1242
        %1254 = vmatpush.bf16.msra.mxu0 %v1241
        %1255 = vmatpush.bf16.msra.mxu0 %v1240
        %1256 = vmatpush.bf16.msra.mxu0 %v1239
        %1257 = vmatpush.bf16.msra.mxu0 %v1238
        %1258 = vmatpush.bf16.msra.mxu0 %v1237
        %1259 = vmatpush.bf16.msra.mxu0 %v1236
        %1260 = vmatmul.bf16.gmra.mxu0 %v1186
        %v1261 = vpop.f32.mrf.mxu0
        %v1262 = vadd.f32 %v1203, %v1261
        %v1263 = vpop.f32.mrf.mxu0
        %v1264 = vadd.f32 %v1203, %v1263
        %1265 = vdwg.mxu0
        %v1266 = vadd.f32 %v1262, %v1061
        %v1267 = vadd.f32 %v1264, %v1062
        %v1268 = vsel %vm436, %v1266, 0.0
        %1269 = vadd.xlane.f32.xlu0 %v1268
        %v1270 = vpop.xlane.xlu0 %1269
        %v1271 = vsel %vm436, %v1267, 0.0
        %1272 = vadd.xlane.f32.xlu0 %v1271
        %v1273 = vpop.xlane.xlu0 %1272
        %v1274 = vmul.f32 %v1270, %v1018
        %v1275 = vmul.f32 %v1273, %v1018
        %v1276 = vsub.f32 %v1266, %v1274
        %v1277 = vsub.f32 %v1267, %v1275
        %v1278 = vmul.f32 %v1276, %v1276
        %v1279 = vmul.f32 %v1277, %v1277
        %v1280 = vsel %vm436, %v1278, 0.0
        %1281 = vadd.xlane.f32.xlu0 %v1280
        %v1282 = vpop.xlane.xlu0 %1281
        %v1283 = vsel %vm436, %v1279, 0.0
        %1284 = vadd.xlane.f32.xlu0 %v1283
        %v1285 = vpop.xlane.xlu0 %1284
        %v1286 = vmul.f32 %v1282, %v1018
        %v1287 = vmul.f32 %v1285, %v1018
        %v1288 = vadd.f32 %v1286, 1e-12
        %v1289 = vadd.f32 %v1287, 1e-12
        %v1290 = vrsqrt.pop %v1288
        %v1291 = vmul.f32 %v1290, %v1288
        %v1292 = vmul.f32 %v1291, %v1290
        %v1293 = vmul.f32 0.5, %v1292
        %v1294 = vsub.f32 1.5, %v1293
        %v1295 = vmul.f32 %v1290, %v1294
        %vm1296 = vweird.f32 %v1288
        %vm1297 = vweird.f32 %v1290
        %vm1298 = vmor %vm1296, %vm1297
        %v1299 = vsel %vm1298, %v1290, %v1295
        %v1300 = vrsqrt.pop %v1289
        %v1301 = vmul.f32 %v1300, %v1289
        %v1302 = vmul.f32 %v1301, %v1300
        %v1303 = vmul.f32 0.5, %v1302
        %v1304 = vsub.f32 1.5, %v1303
        %v1305 = vmul.f32 %v1300, %v1304
        %vm1306 = vweird.f32 %v1289
        %vm1307 = vweird.f32 %v1300
        %vm1308 = vmor %vm1306, %vm1307
        %v1309 = vsel %vm1308, %v1300, %v1305
        %v1310 = vmul.f32 %v1276, %v1299
        %v1311 = vmul.f32 %v1277, %v1309
        %v1312 = vperm.slane %v418, 6
        %v1313 = vmul.f32 %v1310, %v1312
        %v1314 = vmul.f32 %v1311, %v1312
        %v1315 = vperm.slane %v418, 7
        %v1316 = vadd.f32 %v1313, %v1315
        %v1317 = vadd.f32 %v1314, %v1315
        %1318 = vst.msk [vmem:[#allocation5] sm:$0xff] %vm436, %v1316
        %1319 = vst.msk [vmem:[#allocation5 + $0x8] sm:$0xff] %vm436, %v1317
        // Predicated region
        $region57: #{tpu_custom_call.1} parent=47 // pred_check
          %p1320 = pneg %p232
        $region58: #{tpu_custom_call.1} parent=47 // pred_check_branch
          %1322 = sbr.rel (%p1320) target = $region60
        $region59: #{tpu_custom_call.1} parent=47 // pred_region
          %s1323 = smul.u32 2, %s24
          %1325 = vsyncadd [#allocation4], 0
          %s1326 = smul.addr %s1323, 8
          %s1327 = scalar_lea.hbm %s7, %s1326
          %s1328 = sshll.u32 [#allocation5], 4
          %s1329 = int_to_ptr.vmem [resolvable:$true] %s1328
          %s1330 = sshll.u32 %s1327, 4
          %s1331 = int_to_ptr.hbm [resolvable:$true] %s1330
          %1336 = dma.vmem_to_hbm [thread:$0]  %s1329, 256, %s1331, [#allocation4], 128, 128, 8
        $region60: #{tpu_custom_call.1} parent=47 // pred_fallthru
          _
        // Predicated region
        $region61: #{tpu_custom_call.1} parent=47 // pred_check
          %p1337 = pneg %p232
        $region62: #{tpu_custom_call.1} parent=47 // pred_check_branch
          %1339 = sbr.rel (%p1337) target = $region64
        $region63: #{tpu_custom_call.1} parent=47 // pred_region
          %1341 = dma.done [#allocation4], 256
        $region64: #{tpu_custom_call.1} parent=47 // pred_fallthru
          _
      $region48: #{tpu_custom_call.1} parent=5 // pred_fallthru
        _
      %p1342 = scmp.le.s32.totalorder 2, %s15
      // Predicated region
      $region65: #{tpu_custom_call.1} parent=5 // pred_check
        %p1343 = pneg %p1342
      $region66: #{tpu_custom_call.1} parent=5 // pred_check_branch
        %1345 = sbr.rel (%p1343) target = $region68
      $region67: #{tpu_custom_call.1} parent=5 // pred_region
        %s1346 = ssub.s32 %s15, 2
      $region68: #{tpu_custom_call.1} parent=5 // pred_fallthru
        _
    $region6: #{tpu_custom_call.1} parent=1 // loop_footer
      %s19 = sadd.s32 1, %s15
    $region7: #{tpu_custom_call.1} parent=1 // loop_footer_branch
      %14 = sbr.rel target = $region3
    $region8: #{tpu_custom_call.1} parent=1 // loop_exit
      _
    %1347 = vsyncpa [#allocation3], 1
    %s1348 = scalar_lea.sflag [#allocation3], 1
    %1349 = vsyncpa %s1348, 1
    %1350 = vsyncpa [#allocation4], 1
    %s1351 = scalar_lea.sflag [#allocation4], 1
    %1352 = vsyncpa %s1351, 1

</llo_original>
